<compile_context>
chip_gen: v7x
topology: tpu7x:2x2x1
jax: 0.10.0
libtpu: 0.0.40
codegen_flags: <defaults>
</compile_context>

<pallas_src>
import jax
import jax.numpy as jnp
from jax import lax
from jax.experimental import pallas as pl
from jax.experimental.pallas import tpu as pltpu

LN_EPS = 1e-5
BN_EPS = 1e-5


def _layernorm(h, g, b):
    mu = jnp.mean(h, axis=-1, keepdims=True)
    var = jnp.mean(jnp.square(h - mu), axis=-1, keepdims=True)
    return (h - mu) * lax.rsqrt(var + LN_EPS) * g + b


def _spectral_gcn_kernel(
    x_ref,
    w_pt_ref, g_phi_ref, b_phi_ref, g_theta_ref, b_theta_ref,
    w_adj_ref, sc_adj_ref, sh_adj_ref,
    w_wg_top_ref, w_wg_bot_ref, sc_wg_ref, sh_wg_ref,
    w_proj_ref,
    out_ref,
    phi_sc, theta_sc,
):
    rt = pl.program_id(1)
    tb, n_full, c = x_ref.shape          # block: (TB, N, C)
    tile_n = out_ref.shape[1]            # rows handled by this grid step
    inter = g_phi_ref.shape[-1]

    # Once per batch tile: fused phi|theta projection + LayerNorm -> scratch.
    @pl.when(rt == 0)
    def _():
        xb = x_ref[...].astype(jnp.bfloat16).reshape(tb * n_full, c)
        h = jnp.dot(xb, w_pt_ref[...], preferred_element_type=jnp.float32)
        h_phi = _layernorm(h[:, :inter], g_phi_ref[...], b_phi_ref[...])
        h_theta = _layernorm(h[:, inter:], g_theta_ref[...], b_theta_ref[...])
        phi_sc[...] = h_phi.astype(jnp.bfloat16).reshape(tb, n_full, inter)
        theta_sc[...] = h_theta.astype(jnp.bfloat16).reshape(tb, n_full, inter)

    row0 = pl.multiple_of(rt * tile_n, tile_n)
    x_phi = phi_sc[:, pl.ds(row0, tile_n), :]      # (TB, TILE_N, inter) bf16
    x_theta = theta_sc[...]                        # (TB, N, inter)      bf16

    # z_idt[s] = x_phi[s] @ x_theta[s]^T  (transposed-RHS contraction; no .T).
    z_idt = lax.dot_general(
        x_phi, x_theta,
        dimension_numbers=(((2,), (2,)), ((0,), (0,))),
        preferred_element_type=jnp.float32,
    ).reshape(tb * tile_n, n_full)                 # (TB*TILE_N, N) f32
    z_idt_bf = z_idt.astype(jnp.bfloat16)

    # conv_adj (1x1) + folded eval-mode BatchNorm + residual.
    z = jnp.dot(z_idt_bf, w_adj_ref[...], preferred_element_type=jnp.float32)
    z = z * sc_adj_ref[...] + sh_adj_ref[...] + z_idt

    # conv_wg on [z | z_idt] without materializing the concat, + folded BN.
    fz = jnp.dot(z.astype(jnp.bfloat16), w_wg_top_ref[...],
                 preferred_element_type=jnp.float32)
    fz = fz + jnp.dot(z_idt_bf, w_wg_bot_ref[...],
                      preferred_element_type=jnp.float32)
    fz = fz * sc_wg_ref[...] + sh_wg_ref[...]

    # Final projection back to C, residual add, ReLU.
    out = jnp.dot(fz.astype(jnp.bfloat16), w_proj_ref[...],
                  preferred_element_type=jnp.float32)          # (TB*TILE_N, C)
    x_res = x_ref[:, pl.ds(row0, tile_n), :].astype(jnp.float32)
    x_res = x_res.reshape(tb * tile_n, c)
    res = jnp.maximum(x_res + out, 0.0)
    out_ref[...] = res.reshape(tb, tile_n, c).astype(out_ref.dtype)


def _prepare_kernel_params(p, N):
    """Fuse phi|theta weights, fold eval-mode BN into scale/shift, cast to bf16."""
    f32, bf16 = jnp.float32, jnp.bfloat16
    sc_adj = (p["g_adj"] * lax.rsqrt(p["rv_adj"] + BN_EPS)).astype(f32)
    sh_adj = (p["b_adj"] - p["rm_adj"] * sc_adj).astype(f32)
    sc_wg = (p["g_wg"] * lax.rsqrt(p["rv_wg"] + BN_EPS)).astype(f32)
    sh_wg = (p["b_wg"] - p["rm_wg"] * sc_wg).astype(f32)
    return {
        "w_pt": jnp.concatenate([p["w_phi_t"], p["w_theta_t"]], axis=1).astype(bf16),
        "g_phi": p["g_phi"].astype(f32), "b_phi": p["b_phi"].astype(f32),
        "g_theta": p["g_theta"].astype(f32), "b_theta": p["b_theta"].astype(f32),
        "w_adj": p["w_adj_t"].astype(bf16),
        "sc_adj": sc_adj, "sh_adj": sh_adj,
        "w_wg_top": p["w_wg_t"][:N].astype(bf16),   # multiplies z
        "w_wg_bot": p["w_wg_t"][N:].astype(bf16),   # multiplies z_idt
        "sc_wg": sc_wg, "sh_wg": sh_wg,
        "w_proj": p["w_proj_t"].astype(bf16),
    }


_KERNEL_PARAM_ORDER = [
    "w_pt", "g_phi", "b_phi", "g_theta", "b_theta",
    "w_adj", "sc_adj", "sh_adj",
    "w_wg_top", "w_wg_bot", "sc_wg", "sh_wg", "w_proj",
]


def _pick_tiles(B, N):
    """(samples per step, rows per step).  Both divide B / N exactly."""
    if N > 512:
        tile_n = N
        for t in (512, 256, 128, 64, 32, 16, 8):
            if N % t == 0:
                tile_n = t
                break
        return 1, tile_n
    # Small N: batch several samples per grid step for lane/sublane density.
    cap = max(1, min(B, 8, 1024 // max(N, 1)))
    tb = 1
    for cand in range(cap, 0, -1):
        if B % cand == 0:
            tb = cand
            break
    return tb, N


def spectral_gcn(x, params):
    B, N, C = x.shape
    inter = params["w_phi_t"].shape[1]
    kp = _prepare_kernel_params(params, N)
    weights = [kp[name] for name in _KERNEL_PARAM_ORDER]

    tb, tile_n = _pick_tiles(B, N)
    grid = (B // tb, N // tile_n)

    # VMEM budget: weights + x/out blocks (double-buffered) + scratch +
    # matmul intermediates, with headroom; capped below v7x's 64 MiB physical.
    w_bytes = sum(int(w.size) * w.dtype.itemsize for w in weights)
    act_bytes = (2 * tb * N * C * 4              # x block (double-buffered)
                 + 2 * tb * tile_n * C * 4       # out block (double-buffered)
                 + 2 * tb * N * inter * 2        # phi/theta bf16 scratch
                 + 4 * tb * tile_n * N * 4       # z_idt / z / bf16 copies
                 + 2 * tb * tile_n * 2 * N * 4   # fz
                 + tb * N * 2 * inter * 4)       # fused projection temp
    est = 2 * w_bytes + act_bytes                # 2x weights: room for fallback
    vmem_limit = int(min(max(est * 1.4, 24 << 20), 56 << 20))

    def build(single_buffer_weights):
        def wspec(shape):
            nd = len(shape)
            kw = {}
            if single_buffer_weights:
                # Grid-constant index maps: double-buffering them wastes VMEM.
                kw["pipeline_mode"] = pl.Buffered(1)
            return pl.BlockSpec(shape, lambda bt, rt, _nd=nd: (0,) * _nd, **kw)

        in_specs = [pl.BlockSpec((tb, N, C), lambda bt, rt: (bt, 0, 0))]
        in_specs += [wspec(w.shape) for w in weights]

        return pl.pallas_call(
            _spectral_gcn_kernel,
            out_shape=jax.ShapeDtypeStruct((B, N, C), x.dtype),
            grid_spec=pltpu.PrefetchScalarGridSpec(
                num_scalar_prefetch=0,
                grid=grid,
                in_specs=in_specs,
                out_specs=pl.BlockSpec((tb, tile_n, C),
                                       lambda bt, rt: (bt, rt, 0)),
                scratch_shapes=[pltpu.VMEM((tb, N, inter), jnp.bfloat16),
                                pltpu.VMEM((tb, N, inter), jnp.bfloat16)],
            ),
            compiler_params=pltpu.CompilerParams(
                dimension_semantics=("parallel", "arbitrary"),
                vmem_limit_bytes=vmem_limit,
            ),
        )

    args = [x] + weights
    try:
        out = build(True)(*args)
        return jax.block_until_ready(out)
    except Exception:
        # Fallback for jax builds that reject single-buffered pipeline_mode on
        # TPU pallas_call operands; identical kernel, default (double) buffers.
        return build(False)(*args)


def spectral_gcn_ref(x, p):
    """Pure-JAX f32 reference (mirrors the PyTorch forward, eval-mode BN)."""
    def ln(h, g, b):
        mu = h.mean(-1, keepdims=True)
        var = ((h - mu) ** 2).mean(-1, keepdims=True)
        return (h - mu) / jnp.sqrt(var + LN_EPS) * g + b

    x_phi = ln(x @ p["w_phi_t"], p["g_phi"], p["b_phi"])
    x_theta = ln(x @ p["w_theta_t"], p["g_theta"], p["b_theta"])
    z_idt = jnp.einsum("bnk,bmk->bnm", x_phi, x_theta)
    z = jnp.einsum("bnm,mo->bno", z_idt, p["w_adj_t"])
    z = (z - p["rm_adj"]) * (p["g_adj"] / jnp.sqrt(p["rv_adj"] + BN_EPS)) + p["b_adj"]
    z = z + z_idt
    feat = jnp.concatenate([z, z_idt], axis=2)
    fz = jnp.einsum("bnm,mo->bno", feat, p["w_wg_t"])
    fz = (fz - p["rm_wg"]) * (p["g_wg"] / jnp.sqrt(p["rv_wg"] + BN_EPS)) + p["b_wg"]
    out = jnp.einsum("bnm,mc->bnc", fz, p["w_proj_t"])
    return jnp.maximum(x + out, 0.0)


def init_params(key, N, C, ratio=4):
    inter = C // ratio
    ks = jax.random.split(key, 13)
    s = 0.1
    f32 = jnp.float32
    return {
        # Linear weights stored pre-transposed: (in_features, out_features)
        "w_phi_t": (jax.random.normal(ks[0], (C, inter)) * s).astype(f32),
        "g_phi": (jnp.ones((1, inter)) + 0.05 * jax.random.normal(ks[1], (1, inter))).astype(f32),
        "b_phi": (0.05 * jax.random.normal(ks[2], (1, inter))).astype(f32),
        "w_theta_t": (jax.random.normal(ks[3], (C, inter)) * s).astype(f32),
        "g_theta": (jnp.ones((1, inter)) + 0.05 * jax.random.normal(ks[4], (1, inter))).astype(f32),
        "b_theta": (0.05 * jax.random.normal(ks[5], (1, inter))).astype(f32),
        # conv_adj: Conv1d(N, N, 1) weight (N_out, N_in), stored transposed
        "w_adj_t": (jax.random.normal(ks[6], (N, N)) * s).astype(f32),
        "g_adj": (jnp.ones((1, N)) + 0.05 * jax.random.normal(ks[7], (1, N))).astype(f32),
        "b_adj": (0.05 * jax.random.normal(ks[8], (1, N))).astype(f32),
        "rm_adj": (0.05 * jax.random.normal(ks[9], (1, N))).astype(f32),
        "rv_adj": (1.0 + 0.1 * jax.random.uniform(ks[10], (1, N))).astype(f32),
        # conv_wg: Conv1d(2N, 2N, 1) weight, stored transposed
        "w_wg_t": (jax.random.normal(ks[11], (2 * N, 2 * N)) * s).astype(f32),
        "g_wg": jnp.ones((1, 2 * N), f32),
        "b_wg": jnp.zeros((1, 2 * N), f32),
        "rm_wg": jnp.zeros((1, 2 * N), f32),
        "rv_wg": jnp.ones((1, 2 * N), f32),
        # proj: Linear(2N, C) weight, stored pre-transposed (2N, C)
        "w_proj_t": (jax.random.normal(ks[12], (2 * N, C)) * s).astype(f32),
    }


if __name__ == "__main__":
    key = jax.random.PRNGKey(0)
    B, N, C, ratio = 2, 8, 32, 4

    kx, kp = jax.random.split(key)
    x = jax.random.normal(kx, (B, N, C), dtype=jnp.float32)
    params = init_params(kp, N, C, ratio)

    out = spectral_gcn(x, params)
    out = jax.block_until_ready(out)

    ref = spectral_gcn_ref(x, params)
    assert out.shape == (B, N, C)
    # bf16 MXU operands with f32 accumulation -> loose tolerance vs f32 reference.
    assert jnp.allclose(out, ref, atol=5e-2, rtol=5e-2), (
        f"max abs err {jnp.max(jnp.abs(out - ref))}")

    print("KERNEL_OK")
</pallas_src>

<mosaic_0001>
module attributes {stable_mosaic.version = 11 : i64} {
  func.func @_spectral_gcn_kernel(%arg0: i32, %arg1: i32, %arg2: memref<2x8x32xf32, #tpu.memory_space<vmem>>, %arg3: memref<32x16xbf16, #tpu.memory_space<vmem>>, %arg4: memref<1x8xf32, #tpu.memory_space<vmem>>, %arg5: memref<1x8xf32, #tpu.memory_space<vmem>>, %arg6: memref<1x8xf32, #tpu.memory_space<vmem>>, %arg7: memref<1x8xf32, #tpu.memory_space<vmem>>, %arg8: memref<8x8xbf16, #tpu.memory_space<vmem>>, %arg9: memref<1x8xf32, #tpu.memory_space<vmem>>, %arg10: memref<1x8xf32, #tpu.memory_space<vmem>>, %arg11: memref<8x16xbf16, #tpu.memory_space<vmem>>, %arg12: memref<8x16xbf16, #tpu.memory_space<vmem>>, %arg13: memref<1x16xf32, #tpu.memory_space<vmem>>, %arg14: memref<1x16xf32, #tpu.memory_space<vmem>>, %arg15: memref<16x32xbf16, #tpu.memory_space<vmem>>, %arg16: memref<2x8x32xf32, #tpu.memory_space<vmem>>, %arg17: memref<2x8x8xbf16, #tpu.memory_space<vmem>>, %arg18: memref<2x8x8xbf16, #tpu.memory_space<vmem>>) attributes {dimension_semantics = [#tpu.dimension_semantics<parallel>, #tpu.dimension_semantics<arbitrary>], iteration_bounds = array<i64: 1, 1>, scalar_prefetch = 0 : i64, scratch_operands = 2 : i64, tpu.core_type = #tpu.core_type<tc>, window_params = [{transform_indices = @transform_0, window_bounds = array<i64: 2, 8, 32>}, {pipeline_mode = #tpu.pipeline_mode<synchronous>, transform_indices = @transform_1, window_bounds = array<i64: 32, 16>}, {pipeline_mode = #tpu.pipeline_mode<synchronous>, transform_indices = @transform_2, window_bounds = array<i64: 1, 8>}, {pipeline_mode = #tpu.pipeline_mode<synchronous>, transform_indices = @transform_3, window_bounds = array<i64: 1, 8>}, {pipeline_mode = #tpu.pipeline_mode<synchronous>, transform_indices = @transform_4, window_bounds = array<i64: 1, 8>}, {pipeline_mode = #tpu.pipeline_mode<synchronous>, transform_indices = @transform_5, window_bounds = array<i64: 1, 8>}, {pipeline_mode = #tpu.pipeline_mode<synchronous>, transform_indices = @transform_6, window_bounds = array<i64: 8, 8>}, {pipeline_mode = #tpu.pipeline_mode<synchronous>, transform_indices = @transform_7, window_bounds = array<i64: 1, 8>}, {pipeline_mode = #tpu.pipeline_mode<synchronous>, transform_indices = @transform_8, window_bounds = array<i64: 1, 8>}, {pipeline_mode = #tpu.pipeline_mode<synchronous>, transform_indices = @transform_9, window_bounds = array<i64: 8, 16>}, {pipeline_mode = #tpu.pipeline_mode<synchronous>, transform_indices = @transform_10, window_bounds = array<i64: 8, 16>}, {pipeline_mode = #tpu.pipeline_mode<synchronous>, transform_indices = @transform_11, window_bounds = array<i64: 1, 16>}, {pipeline_mode = #tpu.pipeline_mode<synchronous>, transform_indices = @transform_12, window_bounds = array<i64: 1, 16>}, {pipeline_mode = #tpu.pipeline_mode<synchronous>, transform_indices = @transform_13, window_bounds = array<i64: 16, 32>}, {transform_indices = @transform_14, window_bounds = array<i64: 2, 8, 32>}]} {
    %c0_i32 = arith.constant 0 : i32
    %0 = arith.cmpi eq, %arg1, %c0_i32 : i32
    %1 = arith.extui %0 : i1 to i32
    %c0_i32_0 = arith.constant 0 : i32
    %2 = arith.cmpi ne, %1, %c0_i32_0 : i32
    scf.if %2 {
      %c0_31 = arith.constant 0 : index
      %c0_32 = arith.constant 0 : index
      %c0_33 = arith.constant 0 : index
      %43 = vector.load %arg2[%c0_31, %c0_32, %c0_33] : memref<2x8x32xf32, #tpu.memory_space<vmem>>, vector<2x8x32xf32>
      %44 = arith.truncf %43 : vector<2x8x32xf32> to vector<2x8x32xbf16>
      %45 = vector.shape_cast %44 : vector<2x8x32xbf16> to vector<16x32xbf16>
      %c0_34 = arith.constant 0 : index
      %c0_35 = arith.constant 0 : index
      %46 = vector.load %arg3[%c0_34, %c0_35] : memref<32x16xbf16, #tpu.memory_space<vmem>>, vector<32x16xbf16>
      %cst_36 = arith.constant dense<0.000000e+00> : vector<16x16xf32>
      %47 = tpu.matmul %45, %46, %cst_36 {dimension_numbers = #tpu.dot_dimension_numbers<[1], [0], [0], [1], [0, 0, 1, 1], [], []>} : vector<16x32xbf16>, vector<32x16xbf16>, vector<16x16xf32> -> vector<16x16xf32>
      %48 = vector.extract_strided_slice %47 {offsets = [0, 0], sizes = [16, 8], strides = [1, 1]} : vector<16x16xf32> to vector<16x8xf32>
      %c0_37 = arith.constant 0 : index
      %c0_38 = arith.constant 0 : index
      %49 = vector.load %arg4[%c0_37, %c0_38] : memref<1x8xf32, #tpu.memory_space<vmem>>, vector<1x8xf32>
      %c0_39 = arith.constant 0 : index
      %c0_40 = arith.constant 0 : index
      %50 = vector.load %arg5[%c0_39, %c0_40] : memref<1x8xf32, #tpu.memory_space<vmem>>, vector<1x8xf32>
      %cst_41 = arith.constant dense<0.000000e+00> : vector<16xf32>
      %51 = vector.multi_reduction <add>, %48, %cst_41 [1] : vector<16x8xf32> to vector<16xf32>
      %52 = vector.shape_cast %51 : vector<16xf32> to vector<16x1xf32>
      %cst_42 = arith.constant 8.000000e+00 : f32
      %53 = vector.broadcast %cst_42 : f32 to vector<16x1xf32>
      %54 = arith.divf %52, %53 : vector<16x1xf32>
      %55 = vector.broadcast %54 : vector<16x1xf32> to vector<16x8xf32>
      %56 = arith.subf %48, %55 : vector<16x8xf32>
      %57 = arith.mulf %56, %56 : vector<16x8xf32>
      %cst_43 = arith.constant dense<0.000000e+00> : vector<16xf32>
      %58 = vector.multi_reduction <add>, %57, %cst_43 [1] : vector<16x8xf32> to vector<16xf32>
      %59 = vector.shape_cast %58 : vector<16xf32> to vector<16x1xf32>
      %cst_44 = arith.constant 8.000000e+00 : f32
      %60 = vector.broadcast %cst_44 : f32 to vector<16x1xf32>
      %61 = arith.divf %59, %60 : vector<16x1xf32>
      %62 = vector.broadcast %54 : vector<16x1xf32> to vector<16x8xf32>
      %63 = arith.subf %48, %62 : vector<16x8xf32>
      %cst_45 = arith.constant 9.99999974E-6 : f32
      %64 = vector.broadcast %cst_45 : f32 to vector<16x1xf32>
      %65 = arith.addf %61, %64 : vector<16x1xf32>
      %66 = math.rsqrt %65 : vector<16x1xf32>
      %67 = vector.broadcast %66 : vector<16x1xf32> to vector<16x8xf32>
      %68 = arith.mulf %63, %67 : vector<16x8xf32>
      %69 = vector.broadcast %49 : vector<1x8xf32> to vector<16x8xf32>
      %70 = arith.mulf %68, %69 : vector<16x8xf32>
      %71 = vector.broadcast %50 : vector<1x8xf32> to vector<16x8xf32>
      %72 = arith.addf %70, %71 : vector<16x8xf32>
      %73 = vector.extract_strided_slice %47 {offsets = [0, 8], sizes = [16, 8], strides = [1, 1]} : vector<16x16xf32> to vector<16x8xf32>
      %c0_46 = arith.constant 0 : index
      %c0_47 = arith.constant 0 : index
      %74 = vector.load %arg6[%c0_46, %c0_47] : memref<1x8xf32, #tpu.memory_space<vmem>>, vector<1x8xf32>
      %c0_48 = arith.constant 0 : index
      %c0_49 = arith.constant 0 : index
      %75 = vector.load %arg7[%c0_48, %c0_49] : memref<1x8xf32, #tpu.memory_space<vmem>>, vector<1x8xf32>
      %cst_50 = arith.constant dense<0.000000e+00> : vector<16xf32>
      %76 = vector.multi_reduction <add>, %73, %cst_50 [1] : vector<16x8xf32> to vector<16xf32>
      %77 = vector.shape_cast %76 : vector<16xf32> to vector<16x1xf32>
      %cst_51 = arith.constant 8.000000e+00 : f32
      %78 = vector.broadcast %cst_51 : f32 to vector<16x1xf32>
      %79 = arith.divf %77, %78 : vector<16x1xf32>
      %80 = vector.broadcast %79 : vector<16x1xf32> to vector<16x8xf32>
      %81 = arith.subf %73, %80 : vector<16x8xf32>
      %82 = arith.mulf %81, %81 : vector<16x8xf32>
      %cst_52 = arith.constant dense<0.000000e+00> : vector<16xf32>
      %83 = vector.multi_reduction <add>, %82, %cst_52 [1] : vector<16x8xf32> to vector<16xf32>
      %84 = vector.shape_cast %83 : vector<16xf32> to vector<16x1xf32>
      %cst_53 = arith.constant 8.000000e+00 : f32
      %85 = vector.broadcast %cst_53 : f32 to vector<16x1xf32>
      %86 = arith.divf %84, %85 : vector<16x1xf32>
      %87 = vector.broadcast %79 : vector<16x1xf32> to vector<16x8xf32>
      %88 = arith.subf %73, %87 : vector<16x8xf32>
      %cst_54 = arith.constant 9.99999974E-6 : f32
      %89 = vector.broadcast %cst_54 : f32 to vector<16x1xf32>
      %90 = arith.addf %86, %89 : vector<16x1xf32>
      %91 = math.rsqrt %90 : vector<16x1xf32>
      %92 = vector.broadcast %91 : vector<16x1xf32> to vector<16x8xf32>
      %93 = arith.mulf %88, %92 : vector<16x8xf32>
      %94 = vector.broadcast %74 : vector<1x8xf32> to vector<16x8xf32>
      %95 = arith.mulf %93, %94 : vector<16x8xf32>
      %96 = vector.broadcast %75 : vector<1x8xf32> to vector<16x8xf32>
      %97 = arith.addf %95, %96 : vector<16x8xf32>
      %98 = arith.truncf %72 : vector<16x8xf32> to vector<16x8xbf16>
      %99 = vector.shape_cast %98 : vector<16x8xbf16> to vector<2x8x8xbf16>
      %c0_55 = arith.constant 0 : index
      %c0_56 = arith.constant 0 : index
      %c0_57 = arith.constant 0 : index
      %100 = vector.load %arg17[%c0_55, %c0_56, %c0_57] : memref<2x8x8xbf16, #tpu.memory_space<vmem>>, vector<2x8x8xbf16>
      tpu.vector_store %arg17[%c0_55, %c0_56, %c0_57], %99 {strides = array<i32>} : memref<2x8x8xbf16, #tpu.memory_space<vmem>>, vector<2x8x8xbf16>,
      %101 = arith.truncf %97 : vector<16x8xf32> to vector<16x8xbf16>
      %102 = vector.shape_cast %101 : vector<16x8xbf16> to vector<2x8x8xbf16>
      %c0_58 = arith.constant 0 : index
      %c0_59 = arith.constant 0 : index
      %c0_60 = arith.constant 0 : index
      %103 = vector.load %arg18[%c0_58, %c0_59, %c0_60] : memref<2x8x8xbf16, #tpu.memory_space<vmem>>, vector<2x8x8xbf16>
      tpu.vector_store %arg18[%c0_58, %c0_59, %c0_60], %102 {strides = array<i32>} : memref<2x8x8xbf16, #tpu.memory_space<vmem>>, vector<2x8x8xbf16>,
    } else {
    }
    %c8_i32 = arith.constant 8 : i32
    %3 = arith.muli %arg1, %c8_i32 : i32
    %4 = tpu.assume_multiple %3, 8 : i32
    %c0 = arith.constant 0 : index
    %5 = arith.index_cast %4 : i32 to index
    %c0_1 = arith.constant 0 : index
    %6 = vector.load %arg17[%c0, %5, %c0_1] : memref<2x8x8xbf16, #tpu.memory_space<vmem>>, vector<2x8x8xbf16>
    %c0_2 = arith.constant 0 : index
    %c0_3 = arith.constant 0 : index
    %c0_4 = arith.constant 0 : index
    %7 = vector.load %arg18[%c0_2, %c0_3, %c0_4] : memref<2x8x8xbf16, #tpu.memory_space<vmem>>, vector<2x8x8xbf16>
    %cst = arith.constant dense<0.000000e+00> : vector<2x8x8xf32>
    %8 = tpu.matmul %6, %7, %cst {dimension_numbers = #tpu.dot_dimension_numbers<[2], [2], [1], [1], [0, 0, 0, 1, 1, 1], [0], [0]>} : vector<2x8x8xbf16>, vector<2x8x8xbf16>, vector<2x8x8xf32> -> vector<2x8x8xf32>
    %9 = vector.shape_cast %8 : vector<2x8x8xf32> to vector<16x8xf32>
    %10 = arith.truncf %9 : vector<16x8xf32> to vector<16x8xbf16>
    %c0_5 = arith.constant 0 : index
    %c0_6 = arith.constant 0 : index
    %11 = vector.load %arg8[%c0_5, %c0_6] : memref<8x8xbf16, #tpu.memory_space<vmem>>, vector<8x8xbf16>
    %cst_7 = arith.constant dense<0.000000e+00> : vector<16x8xf32>
    %12 = tpu.matmul %10, %11, %cst_7 {dimension_numbers = #tpu.dot_dimension_numbers<[1], [0], [0], [1], [0, 0, 1, 1], [], []>} : vector<16x8xbf16>, vector<8x8xbf16>, vector<16x8xf32> -> vector<16x8xf32>
    %c0_8 = arith.constant 0 : index
    %c0_9 = arith.constant 0 : index
    %13 = vector.load %arg9[%c0_8, %c0_9] : memref<1x8xf32, #tpu.memory_space<vmem>>, vector<1x8xf32>
    %14 = vector.broadcast %13 : vector<1x8xf32> to vector<16x8xf32>
    %15 = arith.mulf %12, %14 : vector<16x8xf32>
    %c0_10 = arith.constant 0 : index
    %c0_11 = arith.constant 0 : index
    %16 = vector.load %arg10[%c0_10, %c0_11] : memref<1x8xf32, #tpu.memory_space<vmem>>, vector<1x8xf32>
    %17 = vector.broadcast %16 : vector<1x8xf32> to vector<16x8xf32>
    %18 = arith.addf %15, %17 : vector<16x8xf32>
    %19 = arith.addf %18, %9 : vector<16x8xf32>
    %20 = arith.truncf %19 : vector<16x8xf32> to vector<16x8xbf16>
    %c0_12 = arith.constant 0 : index
    %c0_13 = arith.constant 0 : index
    %21 = vector.load %arg11[%c0_12, %c0_13] : memref<8x16xbf16, #tpu.memory_space<vmem>>, vector<8x16xbf16>
    %cst_14 = arith.constant dense<0.000000e+00> : vector<16x16xf32>
    %22 = tpu.matmul %20, %21, %cst_14 {dimension_numbers = #tpu.dot_dimension_numbers<[1], [0], [0], [1], [0, 0, 1, 1], [], []>} : vector<16x8xbf16>, vector<8x16xbf16>, vector<16x16xf32> -> vector<16x16xf32>
    %c0_15 = arith.constant 0 : index
    %c0_16 = arith.constant 0 : index
    %23 = vector.load %arg12[%c0_15, %c0_16] : memref<8x16xbf16, #tpu.memory_space<vmem>>, vector<8x16xbf16>
    %cst_17 = arith.constant dense<0.000000e+00> : vector<16x16xf32>
    %24 = tpu.matmul %10, %23, %cst_17 {dimension_numbers = #tpu.dot_dimension_numbers<[1], [0], [0], [1], [0, 0, 1, 1], [], []>} : vector<16x8xbf16>, vector<8x16xbf16>, vector<16x16xf32> -> vector<16x16xf32>
    %25 = arith.addf %22, %24 : vector<16x16xf32>
    %c0_18 = arith.constant 0 : index
    %c0_19 = arith.constant 0 : index
    %26 = vector.load %arg13[%c0_18, %c0_19] : memref<1x16xf32, #tpu.memory_space<vmem>>, vector<1x16xf32>
    %27 = vector.broadcast %26 : vector<1x16xf32> to vector<16x16xf32>
    %28 = arith.mulf %25, %27 : vector<16x16xf32>
    %c0_20 = arith.constant 0 : index
    %c0_21 = arith.constant 0 : index
    %29 = vector.load %arg14[%c0_20, %c0_21] : memref<1x16xf32, #tpu.memory_space<vmem>>, vector<1x16xf32>
    %30 = vector.broadcast %29 : vector<1x16xf32> to vector<16x16xf32>
    %31 = arith.addf %28, %30 : vector<16x16xf32>
    %32 = arith.truncf %31 : vector<16x16xf32> to vector<16x16xbf16>
    %c0_22 = arith.constant 0 : index
    %c0_23 = arith.constant 0 : index
    %33 = vector.load %arg15[%c0_22, %c0_23] : memref<16x32xbf16, #tpu.memory_space<vmem>>, vector<16x32xbf16>
    %cst_24 = arith.constant dense<0.000000e+00> : vector<16x32xf32>
    %34 = tpu.matmul %32, %33, %cst_24 {dimension_numbers = #tpu.dot_dimension_numbers<[1], [0], [0], [1], [0, 0, 1, 1], [], []>} : vector<16x16xbf16>, vector<16x32xbf16>, vector<16x32xf32> -> vector<16x32xf32>
    %c0_25 = arith.constant 0 : index
    %35 = arith.index_cast %4 : i32 to index
    %c0_26 = arith.constant 0 : index
    %36 = vector.load %arg2[%c0_25, %35, %c0_26] : memref<2x8x32xf32, #tpu.memory_space<vmem>>, vector<2x8x32xf32>
    %37 = vector.shape_cast %36 : vector<2x8x32xf32> to vector<16x32xf32>
    %38 = arith.addf %37, %34 : vector<16x32xf32>
    %cst_27 = arith.constant 0.000000e+00 : f32
    %39 = vector.broadcast %cst_27 : f32 to vector<16x32xf32>
    %40 = arith.maximumf %38, %39 : vector<16x32xf32>
    %41 = vector.shape_cast %40 : vector<16x32xf32> to vector<2x8x32xf32>
    %c0_28 = arith.constant 0 : index
    %c0_29 = arith.constant 0 : index
    %c0_30 = arith.constant 0 : index
    %42 = vector.load %arg16[%c0_28, %c0_29, %c0_30] : memref<2x8x32xf32, #tpu.memory_space<vmem>>, vector<2x8x32xf32>
    tpu.vector_store %arg16[%c0_28, %c0_29, %c0_30], %41 {strides = array<i32>} : memref<2x8x32xf32, #tpu.memory_space<vmem>>, vector<2x8x32xf32>,
    return
  }
  func.func @transform_0(%arg0: i32, %arg1: i32) -> (i32, i32, i32) {
    %c0_i32 = arith.constant 0 : i32
    %c0_i32_0 = arith.constant 0 : i32
    %c0_i32_1 = arith.constant 0 : i32
    return %arg0, %c0_i32, %c0_i32_0 : i32, i32, i32
  }
  func.func @transform_1(%arg0: i32, %arg1: i32) -> (i32, i32) {
    %c0_i32 = arith.constant 0 : i32
    %c0_i32_0 = arith.constant 0 : i32
    %c0_i32_1 = arith.constant 0 : i32
    return %c0_i32, %c0_i32_0 : i32, i32
  }
  func.func @transform_2(%arg0: i32, %arg1: i32) -> (i32, i32) {
    %c0_i32 = arith.constant 0 : i32
    %c0_i32_0 = arith.constant 0 : i32
    %c0_i32_1 = arith.constant 0 : i32
    return %c0_i32, %c0_i32_0 : i32, i32
  }
  func.func @transform_3(%arg0: i32, %arg1: i32) -> (i32, i32) {
    %c0_i32 = arith.constant 0 : i32
    %c0_i32_0 = arith.constant 0 : i32
    %c0_i32_1 = arith.constant 0 : i32
    return %c0_i32, %c0_i32_0 : i32, i32
  }
  func.func @transform_4(%arg0: i32, %arg1: i32) -> (i32, i32) {
    %c0_i32 = arith.constant 0 : i32
    %c0_i32_0 = arith.constant 0 : i32
    %c0_i32_1 = arith.constant 0 : i32
    return %c0_i32, %c0_i32_0 : i32, i32
  }
  func.func @transform_5(%arg0: i32, %arg1: i32) -> (i32, i32) {
    %c0_i32 = arith.constant 0 : i32
    %c0_i32_0 = arith.constant 0 : i32
    %c0_i32_1 = arith.constant 0 : i32
    return %c0_i32, %c0_i32_0 : i32, i32
  }
  func.func @transform_6(%arg0: i32, %arg1: i32) -> (i32, i32) {
    %c0_i32 = arith.constant 0 : i32
    %c0_i32_0 = arith.constant 0 : i32
    %c0_i32_1 = arith.constant 0 : i32
    return %c0_i32, %c0_i32_0 : i32, i32
  }
  func.func @transform_7(%arg0: i32, %arg1: i32) -> (i32, i32) {
    %c0_i32 = arith.constant 0 : i32
    %c0_i32_0 = arith.constant 0 : i32
    %c0_i32_1 = arith.constant 0 : i32
    return %c0_i32, %c0_i32_0 : i32, i32
  }
  func.func @transform_8(%arg0: i32, %arg1: i32) -> (i32, i32) {
    %c0_i32 = arith.constant 0 : i32
    %c0_i32_0 = arith.constant 0 : i32
    %c0_i32_1 = arith.constant 0 : i32
    return %c0_i32, %c0_i32_0 : i32, i32
  }
  func.func @transform_9(%arg0: i32, %arg1: i32) -> (i32, i32) {
    %c0_i32 = arith.constant 0 : i32
    %c0_i32_0 = arith.constant 0 : i32
    %c0_i32_1 = arith.constant 0 : i32
    return %c0_i32, %c0_i32_0 : i32, i32
  }
  func.func @transform_10(%arg0: i32, %arg1: i32) -> (i32, i32) {
    %c0_i32 = arith.constant 0 : i32
    %c0_i32_0 = arith.constant 0 : i32
    %c0_i32_1 = arith.constant 0 : i32
    return %c0_i32, %c0_i32_0 : i32, i32
  }
  func.func @transform_11(%arg0: i32, %arg1: i32) -> (i32, i32) {
    %c0_i32 = arith.constant 0 : i32
    %c0_i32_0 = arith.constant 0 : i32
    %c0_i32_1 = arith.constant 0 : i32
    return %c0_i32, %c0_i32_0 : i32, i32
  }
  func.func @transform_12(%arg0: i32, %arg1: i32) -> (i32, i32) {
    %c0_i32 = arith.constant 0 : i32
    %c0_i32_0 = arith.constant 0 : i32
    %c0_i32_1 = arith.constant 0 : i32
    return %c0_i32, %c0_i32_0 : i32, i32
  }
  func.func @transform_13(%arg0: i32, %arg1: i32) -> (i32, i32) {
    %c0_i32 = arith.constant 0 : i32
    %c0_i32_0 = arith.constant 0 : i32
    %c0_i32_1 = arith.constant 0 : i32
    return %c0_i32, %c0_i32_0 : i32, i32
  }
  func.func @transform_14(%arg0: i32, %arg1: i32) -> (i32, i32, i32) {
    %c0_i32 = arith.constant 0 : i32
    %c0_i32_0 = arith.constant 0 : i32
    return %arg0, %arg1, %c0_i32 : i32, i32, i32
  }
}

module attributes {stable_mosaic.version = 11 : i64} {
  func.func @_spectral_gcn_kernel(%arg0: i32, %arg1: i32, %arg2: memref<2x8x32xf32, #tpu.memory_space<vmem>>, %arg3: memref<32x16xbf16, #tpu.memory_space<vmem>>, %arg4: memref<1x8xf32, #tpu.memory_space<vmem>>, %arg5: memref<1x8xf32, #tpu.memory_space<vmem>>, %arg6: memref<1x8xf32, #tpu.memory_space<vmem>>, %arg7: memref<1x8xf32, #tpu.memory_space<vmem>>, %arg8: memref<8x8xbf16, #tpu.memory_space<vmem>>, %arg9: memref<1x8xf32, #tpu.memory_space<vmem>>, %arg10: memref<1x8xf32, #tpu.memory_space<vmem>>, %arg11: memref<8x16xbf16, #tpu.memory_space<vmem>>, %arg12: memref<8x16xbf16, #tpu.memory_space<vmem>>, %arg13: memref<1x16xf32, #tpu.memory_space<vmem>>, %arg14: memref<1x16xf32, #tpu.memory_space<vmem>>, %arg15: memref<16x32xbf16, #tpu.memory_space<vmem>>, %arg16: memref<2x8x32xf32, #tpu.memory_space<vmem>>, %arg17: memref<2x8x8xbf16, #tpu.memory_space<vmem>>, %arg18: memref<2x8x8xbf16, #tpu.memory_space<vmem>>) attributes {dimension_semantics = [#tpu.dimension_semantics<parallel>, #tpu.dimension_semantics<arbitrary>], iteration_bounds = array<i64: 1, 1>, scalar_prefetch = 0 : i64, scratch_operands = 2 : i64, tpu.core_type = #tpu.core_type<tc>, window_params = [{transform_indices = @transform_0, window_bounds = array<i64: 2, 8, 32>}, {pipeline_mode = #tpu.pipeline_mode<synchronous>, transform_indices = @transform_1, window_bounds = array<i64: 32, 16>}, {pipeline_mode = #tpu.pipeline_mode<synchronous>, transform_indices = @transform_2, window_bounds = array<i64: 1, 8>}, {pipeline_mode = #tpu.pipeline_mode<synchronous>, transform_indices = @transform_3, window_bounds = array<i64: 1, 8>}, {pipeline_mode = #tpu.pipeline_mode<synchronous>, transform_indices = @transform_4, window_bounds = array<i64: 1, 8>}, {pipeline_mode = #tpu.pipeline_mode<synchronous>, transform_indices = @transform_5, window_bounds = array<i64: 1, 8>}, {pipeline_mode = #tpu.pipeline_mode<synchronous>, transform_indices = @transform_6, window_bounds = array<i64: 8, 8>}, {pipeline_mode = #tpu.pipeline_mode<synchronous>, transform_indices = @transform_7, window_bounds = array<i64: 1, 8>}, {pipeline_mode = #tpu.pipeline_mode<synchronous>, transform_indices = @transform_8, window_bounds = array<i64: 1, 8>}, {pipeline_mode = #tpu.pipeline_mode<synchronous>, transform_indices = @transform_9, window_bounds = array<i64: 8, 16>}, {pipeline_mode = #tpu.pipeline_mode<synchronous>, transform_indices = @transform_10, window_bounds = array<i64: 8, 16>}, {pipeline_mode = #tpu.pipeline_mode<synchronous>, transform_indices = @transform_11, window_bounds = array<i64: 1, 16>}, {pipeline_mode = #tpu.pipeline_mode<synchronous>, transform_indices = @transform_12, window_bounds = array<i64: 1, 16>}, {pipeline_mode = #tpu.pipeline_mode<synchronous>, transform_indices = @transform_13, window_bounds = array<i64: 16, 32>}, {transform_indices = @transform_14, window_bounds = array<i64: 2, 8, 32>}]} {
    %c0_i32 = arith.constant 0 : i32
    %0 = arith.cmpi eq, %arg1, %c0_i32 : i32
    %1 = arith.extui %0 : i1 to i32
    %c0_i32_0 = arith.constant 0 : i32
    %2 = arith.cmpi ne, %1, %c0_i32_0 : i32
    scf.if %2 {
      %c0_31 = arith.constant 0 : index
      %c0_32 = arith.constant 0 : index
      %c0_33 = arith.constant 0 : index
      %43 = vector.load %arg2[%c0_31, %c0_32, %c0_33] : memref<2x8x32xf32, #tpu.memory_space<vmem>>, vector<2x8x32xf32>
      %44 = arith.truncf %43 : vector<2x8x32xf32> to vector<2x8x32xbf16>
      %45 = vector.shape_cast %44 : vector<2x8x32xbf16> to vector<16x32xbf16>
      %c0_34 = arith.constant 0 : index
      %c0_35 = arith.constant 0 : index
      %46 = vector.load %arg3[%c0_34, %c0_35] : memref<32x16xbf16, #tpu.memory_space<vmem>>, vector<32x16xbf16>
      %cst_36 = arith.constant dense<0.000000e+00> : vector<16x16xf32>
      %47 = tpu.matmul %45, %46, %cst_36 {dimension_numbers = #tpu.dot_dimension_numbers<[1], [0], [0], [1], [0, 0, 1, 1], [], []>} : vector<16x32xbf16>, vector<32x16xbf16>, vector<16x16xf32> -> vector<16x16xf32>
      %48 = vector.extract_strided_slice %47 {offsets = [0, 0], sizes = [16, 8], strides = [1, 1]} : vector<16x16xf32> to vector<16x8xf32>
      %c0_37 = arith.constant 0 : index
      %c0_38 = arith.constant 0 : index
      %49 = vector.load %arg4[%c0_37, %c0_38] : memref<1x8xf32, #tpu.memory_space<vmem>>, vector<1x8xf32>
      %c0_39 = arith.constant 0 : index
      %c0_40 = arith.constant 0 : index
      %50 = vector.load %arg5[%c0_39, %c0_40] : memref<1x8xf32, #tpu.memory_space<vmem>>, vector<1x8xf32>
      %cst_41 = arith.constant dense<0.000000e+00> : vector<16xf32>
      %51 = vector.multi_reduction <add>, %48, %cst_41 [1] : vector<16x8xf32> to vector<16xf32>
      %52 = vector.shape_cast %51 : vector<16xf32> to vector<16x1xf32>
      %cst_42 = arith.constant 8.000000e+00 : f32
      %53 = vector.broadcast %cst_42 : f32 to vector<16x1xf32>
      %54 = arith.divf %52, %53 : vector<16x1xf32>
      %55 = vector.broadcast %54 : vector<16x1xf32> to vector<16x8xf32>
      %56 = arith.subf %48, %55 : vector<16x8xf32>
      %57 = arith.mulf %56, %56 : vector<16x8xf32>
      %cst_43 = arith.constant dense<0.000000e+00> : vector<16xf32>
      %58 = vector.multi_reduction <add>, %57, %cst_43 [1] : vector<16x8xf32> to vector<16xf32>
      %59 = vector.shape_cast %58 : vector<16xf32> to vector<16x1xf32>
      %cst_44 = arith.constant 8.000000e+00 : f32
      %60 = vector.broadcast %cst_44 : f32 to vector<16x1xf32>
      %61 = arith.divf %59, %60 : vector<16x1xf32>
      %62 = vector.broadcast %54 : vector<16x1xf32> to vector<16x8xf32>
      %63 = arith.subf %48, %62 : vector<16x8xf32>
      %cst_45 = arith.constant 9.99999974E-6 : f32
      %64 = vector.broadcast %cst_45 : f32 to vector<16x1xf32>
      %65 = arith.addf %61, %64 : vector<16x1xf32>
      %66 = math.rsqrt %65 : vector<16x1xf32>
      %67 = vector.broadcast %66 : vector<16x1xf32> to vector<16x8xf32>
      %68 = arith.mulf %63, %67 : vector<16x8xf32>
      %69 = vector.broadcast %49 : vector<1x8xf32> to vector<16x8xf32>
      %70 = arith.mulf %68, %69 : vector<16x8xf32>
      %71 = vector.broadcast %50 : vector<1x8xf32> to vector<16x8xf32>
      %72 = arith.addf %70, %71 : vector<16x8xf32>
      %73 = vector.extract_strided_slice %47 {offsets = [0, 8], sizes = [16, 8], strides = [1, 1]} : vector<16x16xf32> to vector<16x8xf32>
      %c0_46 = arith.constant 0 : index
      %c0_47 = arith.constant 0 : index
      %74 = vector.load %arg6[%c0_46, %c0_47] : memref<1x8xf32, #tpu.memory_space<vmem>>, vector<1x8xf32>
      %c0_48 = arith.constant 0 : index
      %c0_49 = arith.constant 0 : index
      %75 = vector.load %arg7[%c0_48, %c0_49] : memref<1x8xf32, #tpu.memory_space<vmem>>, vector<1x8xf32>
      %cst_50 = arith.constant dense<0.000000e+00> : vector<16xf32>
      %76 = vector.multi_reduction <add>, %73, %cst_50 [1] : vector<16x8xf32> to vector<16xf32>
      %77 = vector.shape_cast %76 : vector<16xf32> to vector<16x1xf32>
      %cst_51 = arith.constant 8.000000e+00 : f32
      %78 = vector.broadcast %cst_51 : f32 to vector<16x1xf32>
      %79 = arith.divf %77, %78 : vector<16x1xf32>
      %80 = vector.broadcast %79 : vector<16x1xf32> to vector<16x8xf32>
      %81 = arith.subf %73, %80 : vector<16x8xf32>
      %82 = arith.mulf %81, %81 : vector<16x8xf32>
      %cst_52 = arith.constant dense<0.000000e+00> : vector<16xf32>
      %83 = vector.multi_reduction <add>, %82, %cst_52 [1] : vector<16x8xf32> to vector<16xf32>
      %84 = vector.shape_cast %83 : vector<16xf32> to vector<16x1xf32>
      %cst_53 = arith.constant 8.000000e+00 : f32
      %85 = vector.broadcast %cst_53 : f32 to vector<16x1xf32>
      %86 = arith.divf %84, %85 : vector<16x1xf32>
      %87 = vector.broadcast %79 : vector<16x1xf32> to vector<16x8xf32>
      %88 = arith.subf %73, %87 : vector<16x8xf32>
      %cst_54 = arith.constant 9.99999974E-6 : f32
      %89 = vector.broadcast %cst_54 : f32 to vector<16x1xf32>
      %90 = arith.addf %86, %89 : vector<16x1xf32>
      %91 = math.rsqrt %90 : vector<16x1xf32>
      %92 = vector.broadcast %91 : vector<16x1xf32> to vector<16x8xf32>
      %93 = arith.mulf %88, %92 : vector<16x8xf32>
      %94 = vector.broadcast %74 : vector<1x8xf32> to vector<16x8xf32>
      %95 = arith.mulf %93, %94 : vector<16x8xf32>
      %96 = vector.broadcast %75 : vector<1x8xf32> to vector<16x8xf32>
      %97 = arith.addf %95, %96 : vector<16x8xf32>
      %98 = arith.truncf %72 : vector<16x8xf32> to vector<16x8xbf16>
      %99 = vector.shape_cast %98 : vector<16x8xbf16> to vector<2x8x8xbf16>
      %c0_55 = arith.constant 0 : index
      %c0_56 = arith.constant 0 : index
      %c0_57 = arith.constant 0 : index
      %100 = vector.load %arg17[%c0_55, %c0_56, %c0_57] : memref<2x8x8xbf16, #tpu.memory_space<vmem>>, vector<2x8x8xbf16>
      tpu.vector_store %arg17[%c0_55, %c0_56, %c0_57], %99 {strides = array<i32>} : memref<2x8x8xbf16, #tpu.memory_space<vmem>>, vector<2x8x8xbf16>,
      %101 = arith.truncf %97 : vector<16x8xf32> to vector<16x8xbf16>
      %102 = vector.shape_cast %101 : vector<16x8xbf16> to vector<2x8x8xbf16>
      %c0_58 = arith.constant 0 : index
      %c0_59 = arith.constant 0 : index
      %c0_60 = arith.constant 0 : index
      %103 = vector.load %arg18[%c0_58, %c0_59, %c0_60] : memref<2x8x8xbf16, #tpu.memory_space<vmem>>, vector<2x8x8xbf16>
      tpu.vector_store %arg18[%c0_58, %c0_59, %c0_60], %102 {strides = array<i32>} : memref<2x8x8xbf16, #tpu.memory_space<vmem>>, vector<2x8x8xbf16>,
    } else {
    }
    %c8_i32 = arith.constant 8 : i32
    %3 = arith.muli %arg1, %c8_i32 : i32
    %4 = tpu.assume_multiple %3, 8 : i32
    %c0 = arith.constant 0 : index
    %5 = arith.index_cast %4 : i32 to index
    %c0_1 = arith.constant 0 : index
    %6 = vector.load %arg17[%c0, %5, %c0_1] : memref<2x8x8xbf16, #tpu.memory_space<vmem>>, vector<2x8x8xbf16>
    %c0_2 = arith.constant 0 : index
    %c0_3 = arith.constant 0 : index
    %c0_4 = arith.constant 0 : index
    %7 = vector.load %arg18[%c0_2, %c0_3, %c0_4] : memref<2x8x8xbf16, #tpu.memory_space<vmem>>, vector<2x8x8xbf16>
    %cst = arith.constant dense<0.000000e+00> : vector<2x8x8xf32>
    %8 = tpu.matmul %6, %7, %cst {dimension_numbers = #tpu.dot_dimension_numbers<[2], [2], [1], [1], [0, 0, 0, 1, 1, 1], [0], [0]>} : vector<2x8x8xbf16>, vector<2x8x8xbf16>, vector<2x8x8xf32> -> vector<2x8x8xf32>
    %9 = vector.shape_cast %8 : vector<2x8x8xf32> to vector<16x8xf32>
    %10 = arith.truncf %9 : vector<16x8xf32> to vector<16x8xbf16>
    %c0_5 = arith.constant 0 : index
    %c0_6 = arith.constant 0 : index
    %11 = vector.load %arg8[%c0_5, %c0_6] : memref<8x8xbf16, #tpu.memory_space<vmem>>, vector<8x8xbf16>
    %cst_7 = arith.constant dense<0.000000e+00> : vector<16x8xf32>
    %12 = tpu.matmul %10, %11, %cst_7 {dimension_numbers = #tpu.dot_dimension_numbers<[1], [0], [0], [1], [0, 0, 1, 1], [], []>} : vector<16x8xbf16>, vector<8x8xbf16>, vector<16x8xf32> -> vector<16x8xf32>
    %c0_8 = arith.constant 0 : index
    %c0_9 = arith.constant 0 : index
    %13 = vector.load %arg9[%c0_8, %c0_9] : memref<1x8xf32, #tpu.memory_space<vmem>>, vector<1x8xf32>
    %14 = vector.broadcast %13 : vector<1x8xf32> to vector<16x8xf32>
    %15 = arith.mulf %12, %14 : vector<16x8xf32>
    %c0_10 = arith.constant 0 : index
    %c0_11 = arith.constant 0 : index
    %16 = vector.load %arg10[%c0_10, %c0_11] : memref<1x8xf32, #tpu.memory_space<vmem>>, vector<1x8xf32>
    %17 = vector.broadcast %16 : vector<1x8xf32> to vector<16x8xf32>
    %18 = arith.addf %15, %17 : vector<16x8xf32>
    %19 = arith.addf %18, %9 : vector<16x8xf32>
    %20 = arith.truncf %19 : vector<16x8xf32> to vector<16x8xbf16>
    %c0_12 = arith.constant 0 : index
    %c0_13 = arith.constant 0 : index
    %21 = vector.load %arg11[%c0_12, %c0_13] : memref<8x16xbf16, #tpu.memory_space<vmem>>, vector<8x16xbf16>
    %cst_14 = arith.constant dense<0.000000e+00> : vector<16x16xf32>
    %22 = tpu.matmul %20, %21, %cst_14 {dimension_numbers = #tpu.dot_dimension_numbers<[1], [0], [0], [1], [0, 0, 1, 1], [], []>} : vector<16x8xbf16>, vector<8x16xbf16>, vector<16x16xf32> -> vector<16x16xf32>
    %c0_15 = arith.constant 0 : index
    %c0_16 = arith.constant 0 : index
    %23 = vector.load %arg12[%c0_15, %c0_16] : memref<8x16xbf16, #tpu.memory_space<vmem>>, vector<8x16xbf16>
    %cst_17 = arith.constant dense<0.000000e+00> : vector<16x16xf32>
    %24 = tpu.matmul %10, %23, %cst_17 {dimension_numbers = #tpu.dot_dimension_numbers<[1], [0], [0], [1], [0, 0, 1, 1], [], []>} : vector<16x8xbf16>, vector<8x16xbf16>, vector<16x16xf32> -> vector<16x16xf32>
    %25 = arith.addf %22, %24 : vector<16x16xf32>
    %c0_18 = arith.constant 0 : index
    %c0_19 = arith.constant 0 : index
    %26 = vector.load %arg13[%c0_18, %c0_19] : memref<1x16xf32, #tpu.memory_space<vmem>>, vector<1x16xf32>
    %27 = vector.broadcast %26 : vector<1x16xf32> to vector<16x16xf32>
    %28 = arith.mulf %25, %27 : vector<16x16xf32>
    %c0_20 = arith.constant 0 : index
    %c0_21 = arith.constant 0 : index
    %29 = vector.load %arg14[%c0_20, %c0_21] : memref<1x16xf32, #tpu.memory_space<vmem>>, vector<1x16xf32>
    %30 = vector.broadcast %29 : vector<1x16xf32> to vector<16x16xf32>
    %31 = arith.addf %28, %30 : vector<16x16xf32>
    %32 = arith.truncf %31 : vector<16x16xf32> to vector<16x16xbf16>
    %c0_22 = arith.constant 0 : index
    %c0_23 = arith.constant 0 : index
    %33 = vector.load %arg15[%c0_22, %c0_23] : memref<16x32xbf16, #tpu.memory_space<vmem>>, vector<16x32xbf16>
    %cst_24 = arith.constant dense<0.000000e+00> : vector<16x32xf32>
    %34 = tpu.matmul %32, %33, %cst_24 {dimension_numbers = #tpu.dot_dimension_numbers<[1], [0], [0], [1], [0, 0, 1, 1], [], []>} : vector<16x16xbf16>, vector<16x32xbf16>, vector<16x32xf32> -> vector<16x32xf32>
    %c0_25 = arith.constant 0 : index
    %35 = arith.index_cast %4 : i32 to index
    %c0_26 = arith.constant 0 : index
    %36 = vector.load %arg2[%c0_25, %35, %c0_26] : memref<2x8x32xf32, #tpu.memory_space<vmem>>, vector<2x8x32xf32>
    %37 = vector.shape_cast %36 : vector<2x8x32xf32> to vector<16x32xf32>
    %38 = arith.addf %37, %34 : vector<16x32xf32>
    %cst_27 = arith.constant 0.000000e+00 : f32
    %39 = vector.broadcast %cst_27 : f32 to vector<16x32xf32>
    %40 = arith.maximumf %38, %39 : vector<16x32xf32>
    %41 = vector.shape_cast %40 : vector<16x32xf32> to vector<2x8x32xf32>
    %c0_28 = arith.constant 0 : index
    %c0_29 = arith.constant 0 : index
    %c0_30 = arith.constant 0 : index
    %42 = vector.load %arg16[%c0_28, %c0_29, %c0_30] : memref<2x8x32xf32, #tpu.memory_space<vmem>>, vector<2x8x32xf32>
    tpu.vector_store %arg16[%c0_28, %c0_29, %c0_30], %41 {strides = array<i32>} : memref<2x8x32xf32, #tpu.memory_space<vmem>>, vector<2x8x32xf32>,
    return
  }
  func.func @transform_0(%arg0: i32, %arg1: i32) -> (i32, i32, i32) {
    %c0_i32 = arith.constant 0 : i32
    %c0_i32_0 = arith.constant 0 : i32
    %c0_i32_1 = arith.constant 0 : i32
    return %arg0, %c0_i32, %c0_i32_0 : i32, i32, i32
  }
  func.func @transform_1(%arg0: i32, %arg1: i32) -> (i32, i32) {
    %c0_i32 = arith.constant 0 : i32
    %c0_i32_0 = arith.constant 0 : i32
    %c0_i32_1 = arith.constant 0 : i32
    return %c0_i32, %c0_i32_0 : i32, i32
  }
  func.func @transform_2(%arg0: i32, %arg1: i32) -> (i32, i32) {
    %c0_i32 = arith.constant 0 : i32
    %c0_i32_0 = arith.constant 0 : i32
    %c0_i32_1 = arith.constant 0 : i32
    return %c0_i32, %c0_i32_0 : i32, i32
  }
  func.func @transform_3(%arg0: i32, %arg1: i32) -> (i32, i32) {
    %c0_i32 = arith.constant 0 : i32
    %c0_i32_0 = arith.constant 0 : i32
    %c0_i32_1 = arith.constant 0 : i32
    return %c0_i32, %c0_i32_0 : i32, i32
  }
  func.func @transform_4(%arg0: i32, %arg1: i32) -> (i32, i32) {
    %c0_i32 = arith.constant 0 : i32
    %c0_i32_0 = arith.constant 0 : i32
    %c0_i32_1 = arith.constant 0 : i32
    return %c0_i32, %c0_i32_0 : i32, i32
  }
  func.func @transform_5(%arg0: i32, %arg1: i32) -> (i32, i32) {
    %c0_i32 = arith.constant 0 : i32
    %c0_i32_0 = arith.constant 0 : i32
    %c0_i32_1 = arith.constant 0 : i32
    return %c0_i32, %c0_i32_0 : i32, i32
  }
  func.func @transform_6(%arg0: i32, %arg1: i32) -> (i32, i32) {
    %c0_i32 = arith.constant 0 : i32
    %c0_i32_0 = arith.constant 0 : i32
    %c0_i32_1 = arith.constant 0 : i32
    return %c0_i32, %c0_i32_0 : i32, i32
  }
  func.func @transform_7(%arg0: i32, %arg1: i32) -> (i32, i32) {
    %c0_i32 = arith.constant 0 : i32
    %c0_i32_0 = arith.constant 0 : i32
    %c0_i32_1 = arith.constant 0 : i32
    return %c0_i32, %c0_i32_0 : i32, i32
  }
  func.func @transform_8(%arg0: i32, %arg1: i32) -> (i32, i32) {
    %c0_i32 = arith.constant 0 : i32
    %c0_i32_0 = arith.constant 0 : i32
    %c0_i32_1 = arith.constant 0 : i32
    return %c0_i32, %c0_i32_0 : i32, i32
  }
  func.func @transform_9(%arg0: i32, %arg1: i32) -> (i32, i32) {
    %c0_i32 = arith.constant 0 : i32
    %c0_i32_0 = arith.constant 0 : i32
    %c0_i32_1 = arith.constant 0 : i32
    return %c0_i32, %c0_i32_0 : i32, i32
  }
  func.func @transform_10(%arg0: i32, %arg1: i32) -> (i32, i32) {
    %c0_i32 = arith.constant 0 : i32
    %c0_i32_0 = arith.constant 0 : i32
    %c0_i32_1 = arith.constant 0 : i32
    return %c0_i32, %c0_i32_0 : i32, i32
  }
  func.func @transform_11(%arg0: i32, %arg1: i32) -> (i32, i32) {
    %c0_i32 = arith.constant 0 : i32
    %c0_i32_0 = arith.constant 0 : i32
    %c0_i32_1 = arith.constant 0 : i32
    return %c0_i32, %c0_i32_0 : i32, i32
  }
  func.func @transform_12(%arg0: i32, %arg1: i32) -> (i32, i32) {
    %c0_i32 = arith.constant 0 : i32
    %c0_i32_0 = arith.constant 0 : i32
    %c0_i32_1 = arith.constant 0 : i32
    return %c0_i32, %c0_i32_0 : i32, i32
  }
  func.func @transform_13(%arg0: i32, %arg1: i32) -> (i32, i32) {
    %c0_i32 = arith.constant 0 : i32
    %c0_i32_0 = arith.constant 0 : i32
    %c0_i32_1 = arith.constant 0 : i32
    return %c0_i32, %c0_i32_0 : i32, i32
  }
  func.func @transform_14(%arg0: i32, %arg1: i32) -> (i32, i32, i32) {
    %c0_i32 = arith.constant 0 : i32
    %c0_i32_0 = arith.constant 0 : i32
    return %arg0, %arg1, %c0_i32 : i32, i32, i32
  }
}

</mosaic_0001>

<llo_original>
// kernel: tpu_custom_call.1
$region0: #{tpu_custom_call.1}
  #allocation0 [shape = 'u32[]', space=smem, size = 0x4, offset = 0x4, fixed_abs, tag = 'smem constant byte address 0x4 - core index']
  #allocation1 [shape = 'u32[144,128]{1,0:T(1,128)}', space=vmem, size = 0x12000, scoped, tag = 'internal scratch']
  #allocation2 [shape = 'bf16[2,8,8]{2,1,0:T(8,128)(2,1)}', space=vmem, size = 0x1000, scoped, tag = 'scratch operand']
  #allocation3 [shape = 'bf16[2,8,8]{2,1,0:T(8,128)(2,1)}', space=vmem, size = 0x1000, scoped, tag = 'scratch operand']
  %s0 = inlined_call_operand.vmem [shape: f32[2,8,32], index: 0, kind: input, shape index: {}]
  %s1 = inlined_call_operand.vmem [shape: bf16[32,16], index: 1, kind: input, shape index: {}]
  %s2 = inlined_call_operand.vmem [shape: f32[1,8], index: 2, kind: input, shape index: {}]
  %s3 = inlined_call_operand.vmem [shape: f32[1,8], index: 3, kind: input, shape index: {}]
  %s4 = inlined_call_operand.vmem [shape: f32[1,8], index: 4, kind: input, shape index: {}]
  %s5 = inlined_call_operand.vmem [shape: f32[1,8], index: 5, kind: input, shape index: {}]
  %s6 = inlined_call_operand.vmem [shape: bf16[8,8], index: 6, kind: input, shape index: {}]
  %s7 = inlined_call_operand.vmem [shape: f32[1,8], index: 7, kind: input, shape index: {}]
  %s8 = inlined_call_operand.vmem [shape: f32[1,8], index: 8, kind: input, shape index: {}]
  %s9 = inlined_call_operand.vmem [shape: bf16[8,16], index: 9, kind: input, shape index: {}]
  %s10 = inlined_call_operand.vmem [shape: bf16[8,16], index: 10, kind: input, shape index: {}]
  %s11 = inlined_call_operand.vmem [shape: f32[1,16], index: 11, kind: input, shape index: {}]
  %s12 = inlined_call_operand.vmem [shape: f32[1,16], index: 12, kind: input, shape index: {}]
  %s13 = inlined_call_operand.vmem [shape: bf16[16,32], index: 13, kind: input, shape index: {}]
  %s14 = inlined_call_operand.hbm [shape: f32[2,8,32], index: 14, kind: output, shape index: {}]
  %s15 = sld [smem:[#allocation0]]
  $region70: #{tpu_custom_call.1} parent=0
    _
  %s17 = ssub.s32 1, %s15
  %s18 = scalar_select 0, %s17, %s15
  $region1: #{tpu_custom_call.1} parent=0
    #allocation4 [shape = 'u8[8192]{0}', space=vmem, size = 0x2000, scoped, tag = 'output window, operand 0, single buffered']
    #allocation5 [shape = 's32[1]{0}', space=sflag, size = 0x4, scoped, tag = 'scoped memory for tpu_custom_call.1']
    %19 = vsyncpa [#allocation5], 0
    // Predicated region
    $region2: #{tpu_custom_call.1} parent=1 // pred_check
      _
    $region3: #{tpu_custom_call.1} parent=1 // pred_check_branch
      %21 = sbr.rel (0) target = $region5
    $region4: #{tpu_custom_call.1} parent=1 // pred_region
      _
    $region5: #{tpu_custom_call.1} parent=1 // pred_fallthru
      _
    // Predicated region
    $region6: #{tpu_custom_call.1} parent=1 // pred_check
      _
    $region7: #{tpu_custom_call.1} parent=1 // pred_check_branch
      %23 = sbr.rel (0) target = $region9
    $region8: #{tpu_custom_call.1} parent=1 // pred_region
      _
    $region9: #{tpu_custom_call.1} parent=1 // pred_fallthru
      _
    // Predicated region
    $region10: #{tpu_custom_call.1} parent=1 // pred_check
      _
    $region11: #{tpu_custom_call.1} parent=1 // pred_check_branch
      %25 = sbr.rel (0) target = $region13
    $region12: #{tpu_custom_call.1} parent=1 // pred_region
      _
    $region13: #{tpu_custom_call.1} parent=1 // pred_fallthru
      _
    // Predicated region
    $region14: #{tpu_custom_call.1} parent=1 // pred_check
      _
    $region15: #{tpu_custom_call.1} parent=1 // pred_check_branch
      %27 = sbr.rel (0) target = $region17
    $region16: #{tpu_custom_call.1} parent=1 // pred_region
      _
    $region17: #{tpu_custom_call.1} parent=1 // pred_fallthru
      _
    // Predicated region
    $region18: #{tpu_custom_call.1} parent=1 // pred_check
      _
    $region19: #{tpu_custom_call.1} parent=1 // pred_check_branch
      %29 = sbr.rel (0) target = $region21
    $region20: #{tpu_custom_call.1} parent=1 // pred_region
      _
    $region21: #{tpu_custom_call.1} parent=1 // pred_fallthru
      _
    // Predicated region
    $region22: #{tpu_custom_call.1} parent=1 // pred_check
      _
    $region23: #{tpu_custom_call.1} parent=1 // pred_check_branch
      %31 = sbr.rel (0) target = $region25
    $region24: #{tpu_custom_call.1} parent=1 // pred_region
      _
    $region25: #{tpu_custom_call.1} parent=1 // pred_fallthru
      _
    // Predicated region
    $region26: #{tpu_custom_call.1} parent=1 // pred_check
      _
    $region27: #{tpu_custom_call.1} parent=1 // pred_check_branch
      %33 = sbr.rel (0) target = $region29
    $region28: #{tpu_custom_call.1} parent=1 // pred_region
      _
    $region29: #{tpu_custom_call.1} parent=1 // pred_fallthru
      _
    // Predicated region
    $region30: #{tpu_custom_call.1} parent=1 // pred_check
      _
    $region31: #{tpu_custom_call.1} parent=1 // pred_check_branch
      %35 = sbr.rel (0) target = $region33
    $region32: #{tpu_custom_call.1} parent=1 // pred_region
      _
    $region33: #{tpu_custom_call.1} parent=1 // pred_fallthru
      _
    // Predicated region
    $region34: #{tpu_custom_call.1} parent=1 // pred_check
      _
    $region35: #{tpu_custom_call.1} parent=1 // pred_check_branch
      %37 = sbr.rel (0) target = $region37
    $region36: #{tpu_custom_call.1} parent=1 // pred_region
      _
    $region37: #{tpu_custom_call.1} parent=1 // pred_fallthru
      _
    // Predicated region
    $region38: #{tpu_custom_call.1} parent=1 // pred_check
      _
    $region39: #{tpu_custom_call.1} parent=1 // pred_check_branch
      %39 = sbr.rel (0) target = $region41
    $region40: #{tpu_custom_call.1} parent=1 // pred_region
      _
    $region41: #{tpu_custom_call.1} parent=1 // pred_fallthru
      _
    // Predicated region
    $region42: #{tpu_custom_call.1} parent=1 // pred_check
      _
    $region43: #{tpu_custom_call.1} parent=1 // pred_check_branch
      %41 = sbr.rel (0) target = $region45
    $region44: #{tpu_custom_call.1} parent=1 // pred_region
      _
    $region45: #{tpu_custom_call.1} parent=1 // pred_fallthru
      _
    // Predicated region
    $region46: #{tpu_custom_call.1} parent=1 // pred_check
      _
    $region47: #{tpu_custom_call.1} parent=1 // pred_check_branch
      %43 = sbr.rel (0) target = $region49
    $region48: #{tpu_custom_call.1} parent=1 // pred_region
      _
    $region49: #{tpu_custom_call.1} parent=1 // pred_fallthru
      _
    // Predicated region
    $region50: #{tpu_custom_call.1} parent=1 // pred_check
      _
    $region51: #{tpu_custom_call.1} parent=1 // pred_check_branch
      %45 = sbr.rel (0) target = $region53
    $region52: #{tpu_custom_call.1} parent=1 // pred_region
      _
    $region53: #{tpu_custom_call.1} parent=1 // pred_fallthru
      _
    // Predicated region
    $region54: #{tpu_custom_call.1} parent=1 // pred_check
      _
    $region55: #{tpu_custom_call.1} parent=1 // pred_check_branch
      %47 = sbr.rel (0) target = $region57
    $region56: #{tpu_custom_call.1} parent=1 // pred_region
      _
    $region57: #{tpu_custom_call.1} parent=1 // pred_fallthru
      _
    %p49 = scmp.eq.s32.totalorder 0, 0
    // Predicated region
    $region58: #{tpu_custom_call.1} parent=1 // pred_check
      %p50 = pneg %p49
    $region59: #{tpu_custom_call.1} parent=1 // pred_check_branch
      %52 = sbr.rel (%p50) target = $region61
    $region60: #{tpu_custom_call.1} parent=1 // pred_region
      %v53 = vld [vmem:[%s0] sm:$0xff]
      %v54 = vld [vmem:[%s0 + $0x8] sm:$0xff]
      %v55 = vpack.c.bf16 %v53, %v53
      %v56 = vpack.c.bf16 %v54, %v54
      %v57 = vld [vmem:[%s1] sm:$0xf]
      %v58 = vld [vmem:[%s1 + $0x4] sm:$0xf]
      %v59 = vld [vmem:[%s1 + $0x8] sm:$0xf]
      %v60 = vld [vmem:[%s1 + $0xc] sm:$0xf]
      %v63 = vunpack.c.l.b16 %v55
      %v64 = vunpack.c.l.b16 %v56
      %v65 = vpack.c.b16 %v64, %v63
      %v70 = vunpack.c.l.b16 %v57
      %v71 = vunpack.c.l.b16 %v58
      %v72 = vunpack.c.l.b16 %v59
      %v73 = vunpack.c.l.b16 %v60
      %v74 = vpack.c.b16 %v71, %v70
      %v75 = vpack.c.b16 %v73, %v72
      %vm78 = vcmask 261120
      %v80 = vsel %vm78, %v65, 0
      %82 = vmatprep.subr.bf16.mxu0 0
      %83 = vmatpush1.bf16.msra.mxu0 %v74
      %84 = vmatprep.subr.bf16.mxu0 0
      %85 = vmatpush1.bf16.msra.mxu0 %v75
      %86 = vmatprep.subr.bf16.mxu0 0
      %87 = vmatpush1.bf16.msra.mxu0 0
      %88 = vmatprep.subr.bf16.mxu0 0
      %89 = vmatpush1.bf16.msra.mxu0 0
      %90 = vmatprep.subr.bf16.mxu0 0
      %91 = vmatpush1.bf16.msra.mxu0 0
      %92 = vmatprep.subr.bf16.mxu0 0
      %93 = vmatpush1.bf16.msra.mxu0 0
      %94 = vmatprep.subr.bf16.mxu0 0
      %95 = vmatpush1.bf16.msra.mxu0 0
      %96 = vmatprep.subr.bf16.mxu0 0
      %97 = vmatpush1.bf16.msra.mxu0 0
      %98 = vmatprep.subr.bf16.mxu0 0
      %99 = vmatpush1.bf16.msra.mxu0 0
      %100 = vmatprep.subr.bf16.mxu0 0
      %101 = vmatpush1.bf16.msra.mxu0 0
      %102 = vmatprep.subr.bf16.mxu0 0
      %103 = vmatpush1.bf16.msra.mxu0 0
      %104 = vmatprep.subr.bf16.mxu0 0
      %105 = vmatpush1.bf16.msra.mxu0 0
      %106 = vmatprep.subr.bf16.mxu0 0
      %107 = vmatpush1.bf16.msra.mxu0 0
      %108 = vmatprep.subr.bf16.mxu0 0
      %109 = vmatpush1.bf16.msra.mxu0 0
      %110 = vmatprep.subr.bf16.mxu0 0
      %111 = vmatpush1.bf16.msra.mxu0 0
      %112 = vmatprep.subr.bf16.mxu0 0
      %113 = vmatpush1.bf16.msra.mxu0 0
      %114 = vmatprep.mubr.bf16.mxu0 0
      %115 = vmatmul.mubr.bf16.gmra.mrb[0].mxu0 %v80
      %v116 = vpop.f32.mrb[0].mxu0
      %v117 = vadd.f32 0.0, %v116
      %v118 = vpop.f32.mrb[0].mxu0
      %v119 = vpop.f32.mrb[0].mxu0
      %v120 = vadd.f32 0.0, %v119
      %v121 = vpop.f32.mrb[0].mxu0
      %122 = vdwg.mxu0
      %v123 = vld [vmem:[%s2] sm:$0x1]
      %v124 = vld [vmem:[%s3] sm:$0x1]
      %vm125 = vcmask 64512
      %v126 = vsel %vm125, %v117, 0.0
      %127 = vadd.xlane.f32.xlu0 %v126
      %v128 = vpop.xlane.xlu0 %127
      %v129 = vsel %vm125, %v120, 0.0
      %130 = vadd.xlane.f32.xlu0 %v129
      %v131 = vpop.xlane.xlu0 %130
      %v132 = vrcp.pop 8.0
      %v133 = vmul.f32 %v128, %v132
      %v134 = vmul.f32 %v131, %v132
      %v135 = vsub.f32 %v117, %v133
      %v136 = vsub.f32 %v120, %v134
      %v137 = vmul.f32 %v135, %v135
      %v138 = vmul.f32 %v136, %v136
      %v139 = vsel %vm125, %v137, 0.0
      %140 = vadd.xlane.f32.xlu0 %v139
      %v141 = vpop.xlane.xlu0 %140
      %v142 = vsel %vm125, %v138, 0.0
      %143 = vadd.xlane.f32.xlu0 %v142
      %v144 = vpop.xlane.xlu0 %143
      %v145 = vmul.f32 %v141, %v132
      %v146 = vmul.f32 %v144, %v132
      %v147 = vadd.f32 %v145, 1e-05
      %v148 = vadd.f32 %v146, 1e-05
      %v149 = vrsqrt.pop %v147
      %v150 = vrsqrt.pop %v148
      %v151 = vmul.f32 %v135, %v149
      %v152 = vmul.f32 %v136, %v150
      %v154 = vlaneseq
      %v155 = vshrl.u32 %v154, 7
      %v156 = vsub.s32 0, %v155
      %v157 = vrot.slane %v123, %v156
      %v159 = vmul.f32 %v151, %v157
      %v160 = vmul.f32 %v152, %v157
      %v162 = vlaneseq
      %v163 = vshrl.u32 %v162, 7
      %v164 = vsub.s32 0, %v163
      %v165 = vrot.slane %v124, %v164
      %v167 = vadd.f32 %v159, %v165
      %v168 = vadd.f32 %v160, %v165
      %v169 = vld [vmem:[%s4] sm:$0x1]
      %v170 = vld [vmem:[%s5] sm:$0x1]
      %173 = vrot.lane.b32.xlu0 %v117, 120
      %v174 = vpop.permute.xlu0 %173
      %175 = vrot.lane.b32.xlu0 %v120, 120
      %v176 = vpop.permute.xlu0 %175
      %v179 = vsel %vm125, %v174, 0.0
      %180 = vadd.xlane.f32.xlu0 %v179
      %v181 = vpop.xlane.xlu0 %180
      %v182 = vsel %vm125, %v176, 0.0
      %183 = vadd.xlane.f32.xlu0 %v182
      %v184 = vpop.xlane.xlu0 %183
      %v185 = vmul.f32 %v181, %v132
      %v186 = vmul.f32 %v184, %v132
      %v187 = vsub.f32 %v117, %v185
      %v188 = vsub.f32 %v120, %v186
      %v189 = vmul.f32 %v187, %v187
      %v190 = vmul.f32 %v188, %v188
      %193 = vrot.lane.b32.xlu0 %v189, 120
      %v194 = vpop.permute.xlu0 %193
      %195 = vrot.lane.b32.xlu0 %v190, 120
      %v196 = vpop.permute.xlu0 %195
      %v199 = vsel %vm125, %v194, 0.0
      %200 = vadd.xlane.f32.xlu0 %v199
      %v201 = vpop.xlane.xlu0 %200
      %v202 = vsel %vm125, %v196, 0.0
      %203 = vadd.xlane.f32.xlu0 %v202
      %v204 = vpop.xlane.xlu0 %203
      %v205 = vmul.f32 %v201, %v132
      %v206 = vmul.f32 %v204, %v132
      %v207 = vadd.f32 %v205, 1e-05
      %v208 = vadd.f32 %v206, 1e-05
      %v209 = vrsqrt.pop %v207
      %v210 = vrsqrt.pop %v208
      %v211 = vmul.f32 %v187, %v209
      %v212 = vmul.f32 %v188, %v210
      %v214 = vlaneseq
      %v215 = vshrl.u32 %v214, 7
      %v216 = vsub.s32 0, %v215
      %v217 = vrot.slane %v169, %v216
      %218 = vrot.lane.b32.xlu0 %v217, 8
      %v219 = vpop.permute.xlu0 %218
      %v221 = vmul.f32 %v211, %v219
      %v222 = vmul.f32 %v212, %v219
      %v224 = vlaneseq
      %v225 = vshrl.u32 %v224, 7
      %v226 = vsub.s32 0, %v225
      %v227 = vrot.slane %v170, %v226
      %228 = vrot.lane.b32.xlu0 %v227, 8
      %v229 = vpop.permute.xlu0 %228
      %v231 = vadd.f32 %v221, %v229
      %v232 = vadd.f32 %v222, %v229
      %v233 = vpack.c.bf16 %v168, %v167
      %v235 = vunpack.c.l.b16 %v233
      %v236 = vunpack.c.h.b16 %v233
      %v237 = vpack.c.b16 %v235, %v235
      %v238 = vpack.c.b16 %v236, %v236
      %vm241 = vcmask 60416
      %242 = vst.msk [vmem:[#allocation2] sm:$0xf] %vm241, %v237
      %243 = vst.msk [vmem:[#allocation2 + $0x4] sm:$0xf] %vm241, %v238
      %v244 = vpack.c.bf16 %v232, %v231
      %v246 = vunpack.c.l.b16 %v244
      %v247 = vunpack.c.h.b16 %v244
      %v248 = vpack.c.b16 %v246, %v246
      %v249 = vpack.c.b16 %v247, %v247
      %250 = vrot.lane.b32.xlu0 %v248, 120
      %v251 = vpop.permute.xlu0 %250
      %252 = vrot.lane.b32.xlu0 %v249, 120
      %v253 = vpop.permute.xlu0 %252
      %256 = vst.msk [vmem:[#allocation3] sm:$0xf] %vm241, %v251
      %257 = vst.msk [vmem:[#allocation3 + $0x4] sm:$0xf] %vm241, %v253
    $region61: #{tpu_custom_call.1} parent=1 // pred_fallthru
      _
    %s258 = smul.u32 0, 8
    %s259 = sshra.s32 %s258, 3
    %s260 = sand.u32 %s258, 7
    %s261 = smul.addr %s259, 4
    %s262 = scalar_lea.vmem [#allocation2], %s261
    %v263 = vld [vmem:[%s262] sm:$0xf]
    %v264 = vld [vmem:[%s262 + $0x4] sm:$0xf]
    %v265 = vld [vmem:[#allocation3] sm:$0xf]
    %v266 = vld [vmem:[#allocation3 + $0x4] sm:$0xf]
    %vm267 = vcmask 64512
    %v269 = vsel %vm267, %v263, 0
    %v272 = vsel %vm267, %v265, 0
    %274 = vmatprep.subr.bf16.mxu0 0
    %275 = vmatpush1.bf16.xpose.msra.mxu0 %v272
    %276 = vmatprep.subr.bf16.mxu0 0
    %277 = vmatpush1.bf16.xpose.msra.mxu0 0
    %278 = vmatprep.subr.bf16.mxu0 0
    %279 = vmatpush1.bf16.xpose.msra.mxu0 0
    %280 = vmatprep.subr.bf16.mxu0 0
    %281 = vmatpush1.bf16.xpose.msra.mxu0 0
    %282 = vmatprep.subr.bf16.mxu0 0
    %283 = vmatpush1.bf16.xpose.msra.mxu0 0
    %284 = vmatprep.subr.bf16.mxu0 0
    %285 = vmatpush1.bf16.xpose.msra.mxu0 0
    %286 = vmatprep.subr.bf16.mxu0 0
    %287 = vmatpush1.bf16.xpose.msra.mxu0 0
    %288 = vmatprep.subr.bf16.mxu0 0
    %289 = vmatpush1.bf16.xpose.msra.mxu0 0
    %290 = vmatprep.subr.bf16.mxu0 0
    %291 = vmatpush1.bf16.xpose.msra.mxu0 0
    %292 = vmatprep.subr.bf16.mxu0 0
    %293 = vmatpush1.bf16.xpose.msra.mxu0 0
    %294 = vmatprep.subr.bf16.mxu0 0
    %295 = vmatpush1.bf16.xpose.msra.mxu0 0
    %296 = vmatprep.subr.bf16.mxu0 0
    %297 = vmatpush1.bf16.xpose.msra.mxu0 0
    %298 = vmatprep.subr.bf16.mxu0 0
    %299 = vmatpush1.bf16.xpose.msra.mxu0 0
    %300 = vmatprep.subr.bf16.mxu0 0
    %301 = vmatpush1.bf16.xpose.msra.mxu0 0
    %302 = vmatprep.subr.bf16.mxu0 0
    %303 = vmatpush1.bf16.xpose.msra.mxu0 0
    %304 = vmatprep.subr.bf16.mxu0 0
    %305 = vmatpush1.bf16.xpose.msra.mxu0 0
    %306 = vmatprep.mubr.bf16.mxu0 0
    %307 = vmatmul.mubr.bf16.gmra.mrb[0].mxu0 %v269
    %v308 = vpop.f32.mrb[0].mxu0
    %v309 = vadd.f32 0.0, %v308
    %v310 = vpop.f32.mrb[0].mxu0
    %v311 = vpop.f32.mrb[0].mxu0
    %v312 = vpop.f32.mrb[0].mxu0
    %313 = vdwg.mxu0
    %v315 = vsel %vm267, %v264, 0
    %v318 = vsel %vm267, %v266, 0
    %320 = vmatprep.subr.bf16.mxu0 0
    %321 = vmatpush1.bf16.xpose.msra.mxu0 %v318
    %322 = vmatprep.subr.bf16.mxu0 0
    %323 = vmatpush1.bf16.xpose.msra.mxu0 0
    %324 = vmatprep.subr.bf16.mxu0 0
    %325 = vmatpush1.bf16.xpose.msra.mxu0 0
    %326 = vmatprep.subr.bf16.mxu0 0
    %327 = vmatpush1.bf16.xpose.msra.mxu0 0
    %328 = vmatprep.subr.bf16.mxu0 0
    %329 = vmatpush1.bf16.xpose.msra.mxu0 0
    %330 = vmatprep.subr.bf16.mxu0 0
    %331 = vmatpush1.bf16.xpose.msra.mxu0 0
    %332 = vmatprep.subr.bf16.mxu0 0
    %333 = vmatpush1.bf16.xpose.msra.mxu0 0
    %334 = vmatprep.subr.bf16.mxu0 0
    %335 = vmatpush1.bf16.xpose.msra.mxu0 0
    %336 = vmatprep.subr.bf16.mxu0 0
    %337 = vmatpush1.bf16.xpose.msra.mxu0 0
    %338 = vmatprep.subr.bf16.mxu0 0
    %339 = vmatpush1.bf16.xpose.msra.mxu0 0
    %340 = vmatprep.subr.bf16.mxu0 0
    %341 = vmatpush1.bf16.xpose.msra.mxu0 0
    %342 = vmatprep.subr.bf16.mxu0 0
    %343 = vmatpush1.bf16.xpose.msra.mxu0 0
    %344 = vmatprep.subr.bf16.mxu0 0
    %345 = vmatpush1.bf16.xpose.msra.mxu0 0
    %346 = vmatprep.subr.bf16.mxu0 0
    %347 = vmatpush1.bf16.xpose.msra.mxu0 0
    %348 = vmatprep.subr.bf16.mxu0 0
    %349 = vmatpush1.bf16.xpose.msra.mxu0 0
    %350 = vmatprep.subr.bf16.mxu0 0
    %351 = vmatpush1.bf16.xpose.msra.mxu0 0
    %352 = vmatprep.mubr.bf16.mxu0 0
    %353 = vmatmul.mubr.bf16.gmra.mrb[0].mxu0 %v315
    %v354 = vpop.f32.mrb[0].mxu0
    %v355 = vadd.f32 0.0, %v354
    %v356 = vpop.f32.mrb[0].mxu0
    %v357 = vpop.f32.mrb[0].mxu0
    %v358 = vpop.f32.mrb[0].mxu0
    %359 = vdwg.mxu0
    %v360 = vpack.c.bf16 %v355, %v309
    %v361 = vld [vmem:[%s6] sm:$0xf]
    %v363 = vsel %vm267, %v360, 0
    %vm365 = vcmask 1043456
    %v367 = vsel %vm365, %v361, 0
    %369 = vmatprep.subr.bf16.mxu0 0
    %370 = vmatpush1.bf16.msra.mxu0 %v367
    %371 = vmatprep.subr.bf16.mxu0 0
    %372 = vmatpush1.bf16.msra.mxu0 0
    %373 = vmatprep.subr.bf16.mxu0 0
    %374 = vmatpush1.bf16.msra.mxu0 0
    %375 = vmatprep.subr.bf16.mxu0 0
    %376 = vmatpush1.bf16.msra.mxu0 0
    %377 = vmatprep.subr.bf16.mxu0 0
    %378 = vmatpush1.bf16.msra.mxu0 0
    %379 = vmatprep.subr.bf16.mxu0 0
    %380 = vmatpush1.bf16.msra.mxu0 0
    %381 = vmatprep.subr.bf16.mxu0 0
    %382 = vmatpush1.bf16.msra.mxu0 0
    %383 = vmatprep.subr.bf16.mxu0 0
    %384 = vmatpush1.bf16.msra.mxu0 0
    %385 = vmatprep.subr.bf16.mxu0 0
    %386 = vmatpush1.bf16.msra.mxu0 0
    %387 = vmatprep.subr.bf16.mxu0 0
    %388 = vmatpush1.bf16.msra.mxu0 0
    %389 = vmatprep.subr.bf16.mxu0 0
    %390 = vmatpush1.bf16.msra.mxu0 0
    %391 = vmatprep.subr.bf16.mxu0 0
    %392 = vmatpush1.bf16.msra.mxu0 0
    %393 = vmatprep.subr.bf16.mxu0 0
    %394 = vmatpush1.bf16.msra.mxu0 0
    %395 = vmatprep.subr.bf16.mxu0 0
    %396 = vmatpush1.bf16.msra.mxu0 0
    %397 = vmatprep.subr.bf16.mxu0 0
    %398 = vmatpush1.bf16.msra.mxu0 0
    %399 = vmatprep.subr.bf16.mxu0 0
    %400 = vmatpush1.bf16.msra.mxu0 0
    %401 = vmatprep.mubr.bf16.mxu0 0
    %402 = vmatmul.mubr.bf16.gmra.mrb[0].mxu0 %v363
    %v403 = vpop.f32.mrb[0].mxu0
    %v404 = vadd.f32 0.0, %v403
    %v405 = vpop.f32.mrb[0].mxu0
    %v406 = vpop.f32.mrb[0].mxu0
    %v407 = vadd.f32 0.0, %v406
    %v408 = vpop.f32.mrb[0].mxu0
    %409 = vdwg.mxu0
    %v410 = vld [vmem:[%s7] sm:$0x1]
    %v412 = vlaneseq
    %v413 = vshrl.u32 %v412, 7
    %v414 = vsub.s32 0, %v413
    %v415 = vrot.slane %v410, %v414
    %v417 = vmul.f32 %v404, %v415
    %v418 = vmul.f32 %v407, %v415
    %v419 = vld [vmem:[%s8] sm:$0x1]
    %v421 = vlaneseq
    %v422 = vshrl.u32 %v421, 7
    %v423 = vsub.s32 0, %v422
    %v424 = vrot.slane %v419, %v423
    %v426 = vadd.f32 %v417, %v424
    %v427 = vadd.f32 %v418, %v424
    %v428 = vadd.f32 %v426, %v309
    %v429 = vadd.f32 %v427, %v355
    %v430 = vpack.c.bf16 %v429, %v428
    %v431 = vld [vmem:[%s9] sm:$0xf]
    %v432 = vld [vmem:[%s10] sm:$0xf]
    %v434 = vsel %vm365, %v432, 0
    %436 = vmatprep.subr.bf16.mxu0 0
    %437 = vmatpush1.bf16.msra.mxu0 %v434
    %438 = vmatprep.subr.bf16.mxu0 0
    %439 = vmatpush1.bf16.msra.mxu0 0
    %440 = vmatprep.subr.bf16.mxu0 0
    %441 = vmatpush1.bf16.msra.mxu0 0
    %442 = vmatprep.subr.bf16.mxu0 0
    %443 = vmatpush1.bf16.msra.mxu0 0
    %444 = vmatprep.subr.bf16.mxu0 0
    %445 = vmatpush1.bf16.msra.mxu0 0
    %446 = vmatprep.subr.bf16.mxu0 0
    %447 = vmatpush1.bf16.msra.mxu0 0
    %448 = vmatprep.subr.bf16.mxu0 0
    %449 = vmatpush1.bf16.msra.mxu0 0
    %450 = vmatprep.subr.bf16.mxu0 0
    %451 = vmatpush1.bf16.msra.mxu0 0
    %452 = vmatprep.subr.bf16.mxu0 0
    %453 = vmatpush1.bf16.msra.mxu0 0
    %454 = vmatprep.subr.bf16.mxu0 0
    %455 = vmatpush1.bf16.msra.mxu0 0
    %456 = vmatprep.subr.bf16.mxu0 0
    %457 = vmatpush1.bf16.msra.mxu0 0
    %458 = vmatprep.subr.bf16.mxu0 0
    %459 = vmatpush1.bf16.msra.mxu0 0
    %460 = vmatprep.subr.bf16.mxu0 0
    %461 = vmatpush1.bf16.msra.mxu0 0
    %462 = vmatprep.subr.bf16.mxu0 0
    %463 = vmatpush1.bf16.msra.mxu0 0
    %464 = vmatprep.subr.bf16.mxu0 0
    %465 = vmatpush1.bf16.msra.mxu0 0
    %466 = vmatprep.subr.bf16.mxu0 0
    %467 = vmatpush1.bf16.msra.mxu0 0
    %468 = vmatprep.mubr.bf16.mxu0 0
    %469 = vmatmul.mubr.bf16.gmra.mrb[0].mxu0 %v363
    %v470 = vpop.f32.mrb[0].mxu0
    %v471 = vadd.f32 0.0, %v470
    %v472 = vpop.f32.mrb[0].mxu0
    %v473 = vpop.f32.mrb[0].mxu0
    %v474 = vadd.f32 0.0, %v473
    %v475 = vpop.f32.mrb[0].mxu0
    %476 = vdwg.mxu0
    %v478 = vsel %vm267, %v430, 0
    %v481 = vsel %vm365, %v431, 0
    %483 = vmatprep.subr.bf16.mxu0 0
    %484 = vmatpush1.bf16.msra.mxu0 %v481
    %485 = vmatprep.subr.bf16.mxu0 0
    %486 = vmatpush1.bf16.msra.mxu0 0
    %487 = vmatprep.subr.bf16.mxu0 0
    %488 = vmatpush1.bf16.msra.mxu0 0
    %489 = vmatprep.subr.bf16.mxu0 0
    %490 = vmatpush1.bf16.msra.mxu0 0
    %491 = vmatprep.subr.bf16.mxu0 0
    %492 = vmatpush1.bf16.msra.mxu0 0
    %493 = vmatprep.subr.bf16.mxu0 0
    %494 = vmatpush1.bf16.msra.mxu0 0
    %495 = vmatprep.subr.bf16.mxu0 0
    %496 = vmatpush1.bf16.msra.mxu0 0
    %497 = vmatprep.subr.bf16.mxu0 0
    %498 = vmatpush1.bf16.msra.mxu0 0
    %499 = vmatprep.subr.bf16.mxu0 0
    %500 = vmatpush1.bf16.msra.mxu0 0
    %501 = vmatprep.subr.bf16.mxu0 0
    %502 = vmatpush1.bf16.msra.mxu0 0
    %503 = vmatprep.subr.bf16.mxu0 0
    %504 = vmatpush1.bf16.msra.mxu0 0
    %505 = vmatprep.subr.bf16.mxu0 0
    %506 = vmatpush1.bf16.msra.mxu0 0
    %507 = vmatprep.subr.bf16.mxu0 0
    %508 = vmatpush1.bf16.msra.mxu0 0
    %509 = vmatprep.subr.bf16.mxu0 0
    %510 = vmatpush1.bf16.msra.mxu0 0
    %511 = vmatprep.subr.bf16.mxu0 0
    %512 = vmatpush1.bf16.msra.mxu0 0
    %513 = vmatprep.subr.bf16.mxu0 0
    %514 = vmatpush1.bf16.msra.mxu0 0
    %515 = vmatprep.mubr.bf16.mxu0 0
    %516 = vmatmul.mubr.bf16.gmra.mrb[0].mxu0 %v478
    %v517 = vpop.f32.mrb[0].mxu0
    %v518 = vadd.f32 %v471, %v517
    %v519 = vpop.f32.mrb[0].mxu0
    %v520 = vpop.f32.mrb[0].mxu0
    %v521 = vadd.f32 %v474, %v520
    %v522 = vpop.f32.mrb[0].mxu0
    %523 = vdwg.mxu0
    %v524 = vld [vmem:[%s11] sm:$0x1]
    %v526 = vlaneseq
    %v527 = vshrl.u32 %v526, 7
    %v528 = vsub.s32 0, %v527
    %v529 = vrot.slane %v524, %v528
    %v531 = vmul.f32 %v518, %v529
    %v532 = vmul.f32 %v521, %v529
    %v533 = vld [vmem:[%s12] sm:$0x1]
    %v535 = vlaneseq
    %v536 = vshrl.u32 %v535, 7
    %v537 = vsub.s32 0, %v536
    %v538 = vrot.slane %v533, %v537
    %v540 = vadd.f32 %v531, %v538
    %v541 = vadd.f32 %v532, %v538
    %v542 = vpack.c.bf16 %v541, %v540
    %v543 = vld [vmem:[%s13] sm:$0xf]
    %v544 = vld [vmem:[%s13 + $0x4] sm:$0xf]
    %v547 = vunpack.c.l.b16 %v543
    %v548 = vunpack.c.l.b16 %v544
    %v549 = vpack.c.b16 %v548, %v547
    %vm551 = vcmask 130048
    %v553 = vsel %vm551, %v542, 0
    %555 = vmatprep.subr.bf16.mxu0 0
    %556 = vmatpush1.bf16.msra.mxu0 %v549
    %557 = vmatprep.subr.bf16.mxu0 0
    %558 = vmatpush1.bf16.msra.mxu0 0
    %559 = vmatprep.subr.bf16.mxu0 0
    %560 = vmatpush1.bf16.msra.mxu0 0
    %561 = vmatprep.subr.bf16.mxu0 0
    %562 = vmatpush1.bf16.msra.mxu0 0
    %563 = vmatprep.subr.bf16.mxu0 0
    %564 = vmatpush1.bf16.msra.mxu0 0
    %565 = vmatprep.subr.bf16.mxu0 0
    %566 = vmatpush1.bf16.msra.mxu0 0
    %567 = vmatprep.subr.bf16.mxu0 0
    %568 = vmatpush1.bf16.msra.mxu0 0
    %569 = vmatprep.subr.bf16.mxu0 0
    %570 = vmatpush1.bf16.msra.mxu0 0
    %571 = vmatprep.subr.bf16.mxu0 0
    %572 = vmatpush1.bf16.msra.mxu0 0
    %573 = vmatprep.subr.bf16.mxu0 0
    %574 = vmatpush1.bf16.msra.mxu0 0
    %575 = vmatprep.subr.bf16.mxu0 0
    %576 = vmatpush1.bf16.msra.mxu0 0
    %577 = vmatprep.subr.bf16.mxu0 0
    %578 = vmatpush1.bf16.msra.mxu0 0
    %579 = vmatprep.subr.bf16.mxu0 0
    %580 = vmatpush1.bf16.msra.mxu0 0
    %581 = vmatprep.subr.bf16.mxu0 0
    %582 = vmatpush1.bf16.msra.mxu0 0
    %583 = vmatprep.subr.bf16.mxu0 0
    %584 = vmatpush1.bf16.msra.mxu0 0
    %585 = vmatprep.subr.bf16.mxu0 0
    %586 = vmatpush1.bf16.msra.mxu0 0
    %587 = vmatprep.mubr.bf16.mxu0 0
    %588 = vmatmul.mubr.bf16.gmra.mrb[0].mxu0 %v553
    %v589 = vpop.f32.mrb[0].mxu0
    %v590 = vadd.f32 0.0, %v589
    %v591 = vpop.f32.mrb[0].mxu0
    %v592 = vpop.f32.mrb[0].mxu0
    %v593 = vadd.f32 0.0, %v592
    %v594 = vpop.f32.mrb[0].mxu0
    %595 = vdwg.mxu0
    %s596 = scalar_lea.vmem %s0, %s258
    %v597 = vld [vmem:[%s596] sm:$0xff]
    %v598 = vld [vmem:[%s596 + $0x8] sm:$0xff]
    %v599 = vadd.f32 %v597, %v590
    %v600 = vadd.f32 %v598, %v593
    %v601 = vmax.f32 %v599, 0.0
    %v602 = vmax.f32 %v600, 0.0
    %vm603 = vcmask 261120
    %604 = vst.msk [vmem:[#allocation4] sm:$0xff] %vm603, %v601
    %605 = vst.msk [vmem:[#allocation4 + $0x8] sm:$0xff] %vm603, %v602
    // Predicated region
    $region62: #{tpu_custom_call.1} parent=1 // pred_check
      _
    $region63: #{tpu_custom_call.1} parent=1 // pred_check_branch
      %607 = sbr.rel (0) target = $region65
    $region64: #{tpu_custom_call.1} parent=1 // pred_region
      %s609 = ssub.s32 256, 256
      %610 = vsyncadd [#allocation5], %s609
      %s611 = sshll.u32 [#allocation4], 4
      %s612 = int_to_ptr.vmem [resolvable:$true] %s611
      %617 = dma.vmem_to_hbm [thread:$0]  %s612, 256, %s14, [#allocation5], 128, 128, 8
    $region65: #{tpu_custom_call.1} parent=1 // pred_fallthru
      _
    // Predicated region
    $region66: #{tpu_custom_call.1} parent=1 // pred_check
      _
    $region67: #{tpu_custom_call.1} parent=1 // pred_check_branch
      %619 = sbr.rel (0) target = $region69
    $region68: #{tpu_custom_call.1} parent=1 // pred_region
      %620 = dma.done [#allocation5], 256
    $region69: #{tpu_custom_call.1} parent=1 // pred_fallthru
      _
    %621 = vsyncpa [#allocation5], 1

// kernel: tpu_custom_call.1
$region0: #{tpu_custom_call.1}
  #allocation0 [shape = 'u32[]', space=smem, size = 0x4, offset = 0x4, fixed_abs, tag = 'smem constant byte address 0x4 - core index']
  #allocation1 [shape = 'u32[144,128]{1,0:T(1,128)}', space=vmem, size = 0x12000, scoped, tag = 'internal scratch']
  #allocation2 [shape = 'bf16[2,8,8]{2,1,0:T(8,128)(2,1)}', space=vmem, size = 0x1000, scoped, tag = 'scratch operand']
  #allocation3 [shape = 'bf16[2,8,8]{2,1,0:T(8,128)(2,1)}', space=vmem, size = 0x1000, scoped, tag = 'scratch operand']
  %s0 = inlined_call_operand.vmem [shape: f32[2,8,32], index: 0, kind: input, shape index: {}]
  %s1 = inlined_call_operand.vmem [shape: bf16[32,16], index: 1, kind: input, shape index: {}]
  %s2 = inlined_call_operand.vmem [shape: f32[1,8], index: 2, kind: input, shape index: {}]
  %s3 = inlined_call_operand.vmem [shape: f32[1,8], index: 3, kind: input, shape index: {}]
  %s4 = inlined_call_operand.vmem [shape: f32[1,8], index: 4, kind: input, shape index: {}]
  %s5 = inlined_call_operand.vmem [shape: f32[1,8], index: 5, kind: input, shape index: {}]
  %s6 = inlined_call_operand.vmem [shape: bf16[8,8], index: 6, kind: input, shape index: {}]
  %s7 = inlined_call_operand.vmem [shape: f32[1,8], index: 7, kind: input, shape index: {}]
  %s8 = inlined_call_operand.vmem [shape: f32[1,8], index: 8, kind: input, shape index: {}]
  %s9 = inlined_call_operand.vmem [shape: bf16[8,16], index: 9, kind: input, shape index: {}]
  %s10 = inlined_call_operand.vmem [shape: bf16[8,16], index: 10, kind: input, shape index: {}]
  %s11 = inlined_call_operand.vmem [shape: f32[1,16], index: 11, kind: input, shape index: {}]
  %s12 = inlined_call_operand.vmem [shape: f32[1,16], index: 12, kind: input, shape index: {}]
  %s13 = inlined_call_operand.vmem [shape: bf16[16,32], index: 13, kind: input, shape index: {}]
  %s14 = inlined_call_operand.hbm [shape: f32[2,8,32], index: 14, kind: output, shape index: {}]
  %s15 = sld [smem:[#allocation0]]
  $region70: #{tpu_custom_call.1} parent=0
    _
  %s17 = ssub.s32 1, %s15
  %s18 = scalar_select 0, %s17, %s15
  $region1: #{tpu_custom_call.1} parent=0
    #allocation4 [shape = 'u8[8192]{0}', space=vmem, size = 0x2000, scoped, tag = 'output window, operand 0, single buffered']
    #allocation5 [shape = 's32[1]{0}', space=sflag, size = 0x4, scoped, tag = 'scoped memory for tpu_custom_call.1']
    %19 = vsyncpa [#allocation5], 0
    // Predicated region
    $region2: #{tpu_custom_call.1} parent=1 // pred_check
      _
    $region3: #{tpu_custom_call.1} parent=1 // pred_check_branch
      %21 = sbr.rel (0) target = $region5
    $region4: #{tpu_custom_call.1} parent=1 // pred_region
      _
    $region5: #{tpu_custom_call.1} parent=1 // pred_fallthru
      _
    // Predicated region
    $region6: #{tpu_custom_call.1} parent=1 // pred_check
      _
    $region7: #{tpu_custom_call.1} parent=1 // pred_check_branch
      %23 = sbr.rel (0) target = $region9
    $region8: #{tpu_custom_call.1} parent=1 // pred_region
      _
    $region9: #{tpu_custom_call.1} parent=1 // pred_fallthru
      _
    // Predicated region
    $region10: #{tpu_custom_call.1} parent=1 // pred_check
      _
    $region11: #{tpu_custom_call.1} parent=1 // pred_check_branch
      %25 = sbr.rel (0) target = $region13
    $region12: #{tpu_custom_call.1} parent=1 // pred_region
      _
    $region13: #{tpu_custom_call.1} parent=1 // pred_fallthru
      _
    // Predicated region
    $region14: #{tpu_custom_call.1} parent=1 // pred_check
      _
    $region15: #{tpu_custom_call.1} parent=1 // pred_check_branch
      %27 = sbr.rel (0) target = $region17
    $region16: #{tpu_custom_call.1} parent=1 // pred_region
      _
    $region17: #{tpu_custom_call.1} parent=1 // pred_fallthru
      _
    // Predicated region
    $region18: #{tpu_custom_call.1} parent=1 // pred_check
      _
    $region19: #{tpu_custom_call.1} parent=1 // pred_check_branch
      %29 = sbr.rel (0) target = $region21
    $region20: #{tpu_custom_call.1} parent=1 // pred_region
      _
    $region21: #{tpu_custom_call.1} parent=1 // pred_fallthru
      _
    // Predicated region
    $region22: #{tpu_custom_call.1} parent=1 // pred_check
      _
    $region23: #{tpu_custom_call.1} parent=1 // pred_check_branch
      %31 = sbr.rel (0) target = $region25
    $region24: #{tpu_custom_call.1} parent=1 // pred_region
      _
    $region25: #{tpu_custom_call.1} parent=1 // pred_fallthru
      _
    // Predicated region
    $region26: #{tpu_custom_call.1} parent=1 // pred_check
      _
    $region27: #{tpu_custom_call.1} parent=1 // pred_check_branch
      %33 = sbr.rel (0) target = $region29
    $region28: #{tpu_custom_call.1} parent=1 // pred_region
      _
    $region29: #{tpu_custom_call.1} parent=1 // pred_fallthru
      _
    // Predicated region
    $region30: #{tpu_custom_call.1} parent=1 // pred_check
      _
    $region31: #{tpu_custom_call.1} parent=1 // pred_check_branch
      %35 = sbr.rel (0) target = $region33
    $region32: #{tpu_custom_call.1} parent=1 // pred_region
      _
    $region33: #{tpu_custom_call.1} parent=1 // pred_fallthru
      _
    // Predicated region
    $region34: #{tpu_custom_call.1} parent=1 // pred_check
      _
    $region35: #{tpu_custom_call.1} parent=1 // pred_check_branch
      %37 = sbr.rel (0) target = $region37
    $region36: #{tpu_custom_call.1} parent=1 // pred_region
      _
    $region37: #{tpu_custom_call.1} parent=1 // pred_fallthru
      _
    // Predicated region
    $region38: #{tpu_custom_call.1} parent=1 // pred_check
      _
    $region39: #{tpu_custom_call.1} parent=1 // pred_check_branch
      %39 = sbr.rel (0) target = $region41
    $region40: #{tpu_custom_call.1} parent=1 // pred_region
      _
    $region41: #{tpu_custom_call.1} parent=1 // pred_fallthru
      _
    // Predicated region
    $region42: #{tpu_custom_call.1} parent=1 // pred_check
      _
    $region43: #{tpu_custom_call.1} parent=1 // pred_check_branch
      %41 = sbr.rel (0) target = $region45
    $region44: #{tpu_custom_call.1} parent=1 // pred_region
      _
    $region45: #{tpu_custom_call.1} parent=1 // pred_fallthru
      _
    // Predicated region
    $region46: #{tpu_custom_call.1} parent=1 // pred_check
      _
    $region47: #{tpu_custom_call.1} parent=1 // pred_check_branch
      %43 = sbr.rel (0) target = $region49
    $region48: #{tpu_custom_call.1} parent=1 // pred_region
      _
    $region49: #{tpu_custom_call.1} parent=1 // pred_fallthru
      _
    // Predicated region
    $region50: #{tpu_custom_call.1} parent=1 // pred_check
      _
    $region51: #{tpu_custom_call.1} parent=1 // pred_check_branch
      %45 = sbr.rel (0) target = $region53
    $region52: #{tpu_custom_call.1} parent=1 // pred_region
      _
    $region53: #{tpu_custom_call.1} parent=1 // pred_fallthru
      _
    // Predicated region
    $region54: #{tpu_custom_call.1} parent=1 // pred_check
      _
    $region55: #{tpu_custom_call.1} parent=1 // pred_check_branch
      %47 = sbr.rel (0) target = $region57
    $region56: #{tpu_custom_call.1} parent=1 // pred_region
      _
    $region57: #{tpu_custom_call.1} parent=1 // pred_fallthru
      _
    %p49 = scmp.eq.s32.totalorder 0, 0
    // Predicated region
    $region58: #{tpu_custom_call.1} parent=1 // pred_check
      %p50 = pneg %p49
    $region59: #{tpu_custom_call.1} parent=1 // pred_check_branch
      %52 = sbr.rel (%p50) target = $region61
    $region60: #{tpu_custom_call.1} parent=1 // pred_region
      %v53 = vld [vmem:[%s0] sm:$0xff]
      %v54 = vld [vmem:[%s0 + $0x8] sm:$0xff]
      %v55 = vpack.c.bf16 %v53, %v53
      %v56 = vpack.c.bf16 %v54, %v54
      %v57 = vld [vmem:[%s1] sm:$0xf]
      %v58 = vld [vmem:[%s1 + $0x4] sm:$0xf]
      %v59 = vld [vmem:[%s1 + $0x8] sm:$0xf]
      %v60 = vld [vmem:[%s1 + $0xc] sm:$0xf]
      %v63 = vunpack.c.l.b16 %v55
      %v64 = vunpack.c.l.b16 %v56
      %v65 = vpack.c.b16 %v64, %v63
      %v70 = vunpack.c.l.b16 %v57
      %v71 = vunpack.c.l.b16 %v58
      %v72 = vunpack.c.l.b16 %v59
      %v73 = vunpack.c.l.b16 %v60
      %v74 = vpack.c.b16 %v71, %v70
      %v75 = vpack.c.b16 %v73, %v72
      %vm78 = vcmask 261120
      %v80 = vsel %vm78, %v65, 0
      %82 = vmatprep.subr.bf16.mxu0 0
      %83 = vmatpush1.bf16.msra.mxu0 %v74
      %84 = vmatprep.subr.bf16.mxu0 0
      %85 = vmatpush1.bf16.msra.mxu0 %v75
      %86 = vmatprep.subr.bf16.mxu0 0
      %87 = vmatpush1.bf16.msra.mxu0 0
      %88 = vmatprep.subr.bf16.mxu0 0
      %89 = vmatpush1.bf16.msra.mxu0 0
      %90 = vmatprep.subr.bf16.mxu0 0
      %91 = vmatpush1.bf16.msra.mxu0 0
      %92 = vmatprep.subr.bf16.mxu0 0
      %93 = vmatpush1.bf16.msra.mxu0 0
      %94 = vmatprep.subr.bf16.mxu0 0
      %95 = vmatpush1.bf16.msra.mxu0 0
      %96 = vmatprep.subr.bf16.mxu0 0
      %97 = vmatpush1.bf16.msra.mxu0 0
      %98 = vmatprep.subr.bf16.mxu0 0
      %99 = vmatpush1.bf16.msra.mxu0 0
      %100 = vmatprep.subr.bf16.mxu0 0
      %101 = vmatpush1.bf16.msra.mxu0 0
      %102 = vmatprep.subr.bf16.mxu0 0
      %103 = vmatpush1.bf16.msra.mxu0 0
      %104 = vmatprep.subr.bf16.mxu0 0
      %105 = vmatpush1.bf16.msra.mxu0 0
      %106 = vmatprep.subr.bf16.mxu0 0
      %107 = vmatpush1.bf16.msra.mxu0 0
      %108 = vmatprep.subr.bf16.mxu0 0
      %109 = vmatpush1.bf16.msra.mxu0 0
      %110 = vmatprep.subr.bf16.mxu0 0
      %111 = vmatpush1.bf16.msra.mxu0 0
      %112 = vmatprep.subr.bf16.mxu0 0
      %113 = vmatpush1.bf16.msra.mxu0 0
      %114 = vmatprep.mubr.bf16.mxu0 0
      %115 = vmatmul.mubr.bf16.gmra.mrb[0].mxu0 %v80
      %v116 = vpop.f32.mrb[0].mxu0
      %v117 = vadd.f32 0.0, %v116
      %v118 = vpop.f32.mrb[0].mxu0
      %v119 = vpop.f32.mrb[0].mxu0
      %v120 = vadd.f32 0.0, %v119
      %v121 = vpop.f32.mrb[0].mxu0
      %122 = vdwg.mxu0
      %v123 = vld [vmem:[%s2] sm:$0x1]
      %v124 = vld [vmem:[%s3] sm:$0x1]
      %vm125 = vcmask 64512
      %v126 = vsel %vm125, %v117, 0.0
      %127 = vadd.xlane.f32.xlu0 %v126
      %v128 = vpop.xlane.xlu0 %127
      %v129 = vsel %vm125, %v120, 0.0
      %130 = vadd.xlane.f32.xlu0 %v129
      %v131 = vpop.xlane.xlu0 %130
      %v132 = vrcp.pop 8.0
      %v133 = vmul.f32 %v128, %v132
      %v134 = vmul.f32 %v131, %v132
      %v135 = vsub.f32 %v117, %v133
      %v136 = vsub.f32 %v120, %v134
      %v137 = vmul.f32 %v135, %v135
      %v138 = vmul.f32 %v136, %v136
      %v139 = vsel %vm125, %v137, 0.0
      %140 = vadd.xlane.f32.xlu0 %v139
      %v141 = vpop.xlane.xlu0 %140
      %v142 = vsel %vm125, %v138, 0.0
      %143 = vadd.xlane.f32.xlu0 %v142
      %v144 = vpop.xlane.xlu0 %143
      %v145 = vmul.f32 %v141, %v132
      %v146 = vmul.f32 %v144, %v132
      %v147 = vadd.f32 %v145, 1e-05
      %v148 = vadd.f32 %v146, 1e-05
      %v149 = vrsqrt.pop %v147
      %v150 = vrsqrt.pop %v148
      %v151 = vmul.f32 %v135, %v149
      %v152 = vmul.f32 %v136, %v150
      %v154 = vlaneseq
      %v155 = vshrl.u32 %v154, 7
      %v156 = vsub.s32 0, %v155
      %v157 = vrot.slane %v123, %v156
      %v159 = vmul.f32 %v151, %v157
      %v160 = vmul.f32 %v152, %v157
      %v162 = vlaneseq
      %v163 = vshrl.u32 %v162, 7
      %v164 = vsub.s32 0, %v163
      %v165 = vrot.slane %v124, %v164
      %v167 = vadd.f32 %v159, %v165
      %v168 = vadd.f32 %v160, %v165
      %v169 = vld [vmem:[%s4] sm:$0x1]
      %v170 = vld [vmem:[%s5] sm:$0x1]
      %173 = vrot.lane.b32.xlu0 %v117, 120
      %v174 = vpop.permute.xlu0 %173
      %175 = vrot.lane.b32.xlu0 %v120, 120
      %v176 = vpop.permute.xlu0 %175
      %v179 = vsel %vm125, %v174, 0.0
      %180 = vadd.xlane.f32.xlu0 %v179
      %v181 = vpop.xlane.xlu0 %180
      %v182 = vsel %vm125, %v176, 0.0
      %183 = vadd.xlane.f32.xlu0 %v182
      %v184 = vpop.xlane.xlu0 %183
      %v185 = vmul.f32 %v181, %v132
      %v186 = vmul.f32 %v184, %v132
      %v187 = vsub.f32 %v117, %v185
      %v188 = vsub.f32 %v120, %v186
      %v189 = vmul.f32 %v187, %v187
      %v190 = vmul.f32 %v188, %v188
      %193 = vrot.lane.b32.xlu0 %v189, 120
      %v194 = vpop.permute.xlu0 %193
      %195 = vrot.lane.b32.xlu0 %v190, 120
      %v196 = vpop.permute.xlu0 %195
      %v199 = vsel %vm125, %v194, 0.0
      %200 = vadd.xlane.f32.xlu0 %v199
      %v201 = vpop.xlane.xlu0 %200
      %v202 = vsel %vm125, %v196, 0.0
      %203 = vadd.xlane.f32.xlu0 %v202
      %v204 = vpop.xlane.xlu0 %203
      %v205 = vmul.f32 %v201, %v132
      %v206 = vmul.f32 %v204, %v132
      %v207 = vadd.f32 %v205, 1e-05
      %v208 = vadd.f32 %v206, 1e-05
      %v209 = vrsqrt.pop %v207
      %v210 = vrsqrt.pop %v208
      %v211 = vmul.f32 %v187, %v209
      %v212 = vmul.f32 %v188, %v210
      %v214 = vlaneseq
      %v215 = vshrl.u32 %v214, 7
      %v216 = vsub.s32 0, %v215
      %v217 = vrot.slane %v169, %v216
      %218 = vrot.lane.b32.xlu0 %v217, 8
      %v219 = vpop.permute.xlu0 %218
      %v221 = vmul.f32 %v211, %v219
      %v222 = vmul.f32 %v212, %v219
      %v224 = vlaneseq
      %v225 = vshrl.u32 %v224, 7
      %v226 = vsub.s32 0, %v225
      %v227 = vrot.slane %v170, %v226
      %228 = vrot.lane.b32.xlu0 %v227, 8
      %v229 = vpop.permute.xlu0 %228
      %v231 = vadd.f32 %v221, %v229
      %v232 = vadd.f32 %v222, %v229
      %v233 = vpack.c.bf16 %v168, %v167
      %v235 = vunpack.c.l.b16 %v233
      %v236 = vunpack.c.h.b16 %v233
      %v237 = vpack.c.b16 %v235, %v235
      %v238 = vpack.c.b16 %v236, %v236
      %vm241 = vcmask 60416
      %242 = vst.msk [vmem:[#allocation2] sm:$0xf] %vm241, %v237
      %243 = vst.msk [vmem:[#allocation2 + $0x4] sm:$0xf] %vm241, %v238
      %v244 = vpack.c.bf16 %v232, %v231
      %v246 = vunpack.c.l.b16 %v244
      %v247 = vunpack.c.h.b16 %v244
      %v248 = vpack.c.b16 %v246, %v246
      %v249 = vpack.c.b16 %v247, %v247
      %250 = vrot.lane.b32.xlu0 %v248, 120
      %v251 = vpop.permute.xlu0 %250
      %252 = vrot.lane.b32.xlu0 %v249, 120
      %v253 = vpop.permute.xlu0 %252
      %256 = vst.msk [vmem:[#allocation3] sm:$0xf] %vm241, %v251
      %257 = vst.msk [vmem:[#allocation3 + $0x4] sm:$0xf] %vm241, %v253
    $region61: #{tpu_custom_call.1} parent=1 // pred_fallthru
      _
    %s258 = smul.u32 0, 8
    %s259 = sshra.s32 %s258, 3
    %s260 = sand.u32 %s258, 7
    %s261 = smul.addr %s259, 4
    %s262 = scalar_lea.vmem [#allocation2], %s261
    %v263 = vld [vmem:[%s262] sm:$0xf]
    %v264 = vld [vmem:[%s262 + $0x4] sm:$0xf]
    %v265 = vld [vmem:[#allocation3] sm:$0xf]
    %v266 = vld [vmem:[#allocation3 + $0x4] sm:$0xf]
    %vm267 = vcmask 64512
    %v269 = vsel %vm267, %v263, 0
    %v272 = vsel %vm267, %v265, 0
    %274 = vmatprep.subr.bf16.mxu0 0
    %275 = vmatpush1.bf16.xpose.msra.mxu0 %v272
    %276 = vmatprep.subr.bf16.mxu0 0
    %277 = vmatpush1.bf16.xpose.msra.mxu0 0
    %278 = vmatprep.subr.bf16.mxu0 0
    %279 = vmatpush1.bf16.xpose.msra.mxu0 0
    %280 = vmatprep.subr.bf16.mxu0 0
    %281 = vmatpush1.bf16.xpose.msra.mxu0 0
    %282 = vmatprep.subr.bf16.mxu0 0
    %283 = vmatpush1.bf16.xpose.msra.mxu0 0
    %284 = vmatprep.subr.bf16.mxu0 0
    %285 = vmatpush1.bf16.xpose.msra.mxu0 0
    %286 = vmatprep.subr.bf16.mxu0 0
    %287 = vmatpush1.bf16.xpose.msra.mxu0 0
    %288 = vmatprep.subr.bf16.mxu0 0
    %289 = vmatpush1.bf16.xpose.msra.mxu0 0
    %290 = vmatprep.subr.bf16.mxu0 0
    %291 = vmatpush1.bf16.xpose.msra.mxu0 0
    %292 = vmatprep.subr.bf16.mxu0 0
    %293 = vmatpush1.bf16.xpose.msra.mxu0 0
    %294 = vmatprep.subr.bf16.mxu0 0
    %295 = vmatpush1.bf16.xpose.msra.mxu0 0
    %296 = vmatprep.subr.bf16.mxu0 0
    %297 = vmatpush1.bf16.xpose.msra.mxu0 0
    %298 = vmatprep.subr.bf16.mxu0 0
    %299 = vmatpush1.bf16.xpose.msra.mxu0 0
    %300 = vmatprep.subr.bf16.mxu0 0
    %301 = vmatpush1.bf16.xpose.msra.mxu0 0
    %302 = vmatprep.subr.bf16.mxu0 0
    %303 = vmatpush1.bf16.xpose.msra.mxu0 0
    %304 = vmatprep.subr.bf16.mxu0 0
    %305 = vmatpush1.bf16.xpose.msra.mxu0 0
    %306 = vmatprep.mubr.bf16.mxu0 0
    %307 = vmatmul.mubr.bf16.gmra.mrb[0].mxu0 %v269
    %v308 = vpop.f32.mrb[0].mxu0
    %v309 = vadd.f32 0.0, %v308
    %v310 = vpop.f32.mrb[0].mxu0
    %v311 = vpop.f32.mrb[0].mxu0
    %v312 = vpop.f32.mrb[0].mxu0
    %313 = vdwg.mxu0
    %v315 = vsel %vm267, %v264, 0
    %v318 = vsel %vm267, %v266, 0
    %320 = vmatprep.subr.bf16.mxu0 0
    %321 = vmatpush1.bf16.xpose.msra.mxu0 %v318
    %322 = vmatprep.subr.bf16.mxu0 0
    %323 = vmatpush1.bf16.xpose.msra.mxu0 0
    %324 = vmatprep.subr.bf16.mxu0 0
    %325 = vmatpush1.bf16.xpose.msra.mxu0 0
    %326 = vmatprep.subr.bf16.mxu0 0
    %327 = vmatpush1.bf16.xpose.msra.mxu0 0
    %328 = vmatprep.subr.bf16.mxu0 0
    %329 = vmatpush1.bf16.xpose.msra.mxu0 0
    %330 = vmatprep.subr.bf16.mxu0 0
    %331 = vmatpush1.bf16.xpose.msra.mxu0 0
    %332 = vmatprep.subr.bf16.mxu0 0
    %333 = vmatpush1.bf16.xpose.msra.mxu0 0
    %334 = vmatprep.subr.bf16.mxu0 0
    %335 = vmatpush1.bf16.xpose.msra.mxu0 0
    %336 = vmatprep.subr.bf16.mxu0 0
    %337 = vmatpush1.bf16.xpose.msra.mxu0 0
    %338 = vmatprep.subr.bf16.mxu0 0
    %339 = vmatpush1.bf16.xpose.msra.mxu0 0
    %340 = vmatprep.subr.bf16.mxu0 0
    %341 = vmatpush1.bf16.xpose.msra.mxu0 0
    %342 = vmatprep.subr.bf16.mxu0 0
    %343 = vmatpush1.bf16.xpose.msra.mxu0 0
    %344 = vmatprep.subr.bf16.mxu0 0
    %345 = vmatpush1.bf16.xpose.msra.mxu0 0
    %346 = vmatprep.subr.bf16.mxu0 0
    %347 = vmatpush1.bf16.xpose.msra.mxu0 0
    %348 = vmatprep.subr.bf16.mxu0 0
    %349 = vmatpush1.bf16.xpose.msra.mxu0 0
    %350 = vmatprep.subr.bf16.mxu0 0
    %351 = vmatpush1.bf16.xpose.msra.mxu0 0
    %352 = vmatprep.mubr.bf16.mxu0 0
    %353 = vmatmul.mubr.bf16.gmra.mrb[0].mxu0 %v315
    %v354 = vpop.f32.mrb[0].mxu0
    %v355 = vadd.f32 0.0, %v354
    %v356 = vpop.f32.mrb[0].mxu0
    %v357 = vpop.f32.mrb[0].mxu0
    %v358 = vpop.f32.mrb[0].mxu0
    %359 = vdwg.mxu0
    %v360 = vpack.c.bf16 %v355, %v309
    %v361 = vld [vmem:[%s6] sm:$0xf]
    %v363 = vsel %vm267, %v360, 0
    %vm365 = vcmask 1043456
    %v367 = vsel %vm365, %v361, 0
    %369 = vmatprep.subr.bf16.mxu0 0
    %370 = vmatpush1.bf16.msra.mxu0 %v367
    %371 = vmatprep.subr.bf16.mxu0 0
    %372 = vmatpush1.bf16.msra.mxu0 0
    %373 = vmatprep.subr.bf16.mxu0 0
    %374 = vmatpush1.bf16.msra.mxu0 0
    %375 = vmatprep.subr.bf16.mxu0 0
    %376 = vmatpush1.bf16.msra.mxu0 0
    %377 = vmatprep.subr.bf16.mxu0 0
    %378 = vmatpush1.bf16.msra.mxu0 0
    %379 = vmatprep.subr.bf16.mxu0 0
    %380 = vmatpush1.bf16.msra.mxu0 0
    %381 = vmatprep.subr.bf16.mxu0 0
    %382 = vmatpush1.bf16.msra.mxu0 0
    %383 = vmatprep.subr.bf16.mxu0 0
    %384 = vmatpush1.bf16.msra.mxu0 0
    %385 = vmatprep.subr.bf16.mxu0 0
    %386 = vmatpush1.bf16.msra.mxu0 0
    %387 = vmatprep.subr.bf16.mxu0 0
    %388 = vmatpush1.bf16.msra.mxu0 0
    %389 = vmatprep.subr.bf16.mxu0 0
    %390 = vmatpush1.bf16.msra.mxu0 0
    %391 = vmatprep.subr.bf16.mxu0 0
    %392 = vmatpush1.bf16.msra.mxu0 0
    %393 = vmatprep.subr.bf16.mxu0 0
    %394 = vmatpush1.bf16.msra.mxu0 0
    %395 = vmatprep.subr.bf16.mxu0 0
    %396 = vmatpush1.bf16.msra.mxu0 0
    %397 = vmatprep.subr.bf16.mxu0 0
    %398 = vmatpush1.bf16.msra.mxu0 0
    %399 = vmatprep.subr.bf16.mxu0 0
    %400 = vmatpush1.bf16.msra.mxu0 0
    %401 = vmatprep.mubr.bf16.mxu0 0
    %402 = vmatmul.mubr.bf16.gmra.mrb[0].mxu0 %v363
    %v403 = vpop.f32.mrb[0].mxu0
    %v404 = vadd.f32 0.0, %v403
    %v405 = vpop.f32.mrb[0].mxu0
    %v406 = vpop.f32.mrb[0].mxu0
    %v407 = vadd.f32 0.0, %v406
    %v408 = vpop.f32.mrb[0].mxu0
    %409 = vdwg.mxu0
    %v410 = vld [vmem:[%s7] sm:$0x1]
    %v412 = vlaneseq
    %v413 = vshrl.u32 %v412, 7
    %v414 = vsub.s32 0, %v413
    %v415 = vrot.slane %v410, %v414
    %v417 = vmul.f32 %v404, %v415
    %v418 = vmul.f32 %v407, %v415
    %v419 = vld [vmem:[%s8] sm:$0x1]
    %v421 = vlaneseq
    %v422 = vshrl.u32 %v421, 7
    %v423 = vsub.s32 0, %v422
    %v424 = vrot.slane %v419, %v423
    %v426 = vadd.f32 %v417, %v424
    %v427 = vadd.f32 %v418, %v424
    %v428 = vadd.f32 %v426, %v309
    %v429 = vadd.f32 %v427, %v355
    %v430 = vpack.c.bf16 %v429, %v428
    %v431 = vld [vmem:[%s9] sm:$0xf]
    %v432 = vld [vmem:[%s10] sm:$0xf]
    %v434 = vsel %vm365, %v432, 0
    %436 = vmatprep.subr.bf16.mxu0 0
    %437 = vmatpush1.bf16.msra.mxu0 %v434
    %438 = vmatprep.subr.bf16.mxu0 0
    %439 = vmatpush1.bf16.msra.mxu0 0
    %440 = vmatprep.subr.bf16.mxu0 0
    %441 = vmatpush1.bf16.msra.mxu0 0
    %442 = vmatprep.subr.bf16.mxu0 0
    %443 = vmatpush1.bf16.msra.mxu0 0
    %444 = vmatprep.subr.bf16.mxu0 0
    %445 = vmatpush1.bf16.msra.mxu0 0
    %446 = vmatprep.subr.bf16.mxu0 0
    %447 = vmatpush1.bf16.msra.mxu0 0
    %448 = vmatprep.subr.bf16.mxu0 0
    %449 = vmatpush1.bf16.msra.mxu0 0
    %450 = vmatprep.subr.bf16.mxu0 0
    %451 = vmatpush1.bf16.msra.mxu0 0
    %452 = vmatprep.subr.bf16.mxu0 0
    %453 = vmatpush1.bf16.msra.mxu0 0
    %454 = vmatprep.subr.bf16.mxu0 0
    %455 = vmatpush1.bf16.msra.mxu0 0
    %456 = vmatprep.subr.bf16.mxu0 0
    %457 = vmatpush1.bf16.msra.mxu0 0
    %458 = vmatprep.subr.bf16.mxu0 0
    %459 = vmatpush1.bf16.msra.mxu0 0
    %460 = vmatprep.subr.bf16.mxu0 0
    %461 = vmatpush1.bf16.msra.mxu0 0
    %462 = vmatprep.subr.bf16.mxu0 0
    %463 = vmatpush1.bf16.msra.mxu0 0
    %464 = vmatprep.subr.bf16.mxu0 0
    %465 = vmatpush1.bf16.msra.mxu0 0
    %466 = vmatprep.subr.bf16.mxu0 0
    %467 = vmatpush1.bf16.msra.mxu0 0
    %468 = vmatprep.mubr.bf16.mxu0 0
    %469 = vmatmul.mubr.bf16.gmra.mrb[0].mxu0 %v363
    %v470 = vpop.f32.mrb[0].mxu0
    %v471 = vadd.f32 0.0, %v470
    %v472 = vpop.f32.mrb[0].mxu0
    %v473 = vpop.f32.mrb[0].mxu0
    %v474 = vadd.f32 0.0, %v473
    %v475 = vpop.f32.mrb[0].mxu0
    %476 = vdwg.mxu0
    %v478 = vsel %vm267, %v430, 0
    %v481 = vsel %vm365, %v431, 0
    %483 = vmatprep.subr.bf16.mxu0 0
    %484 = vmatpush1.bf16.msra.mxu0 %v481
    %485 = vmatprep.subr.bf16.mxu0 0
    %486 = vmatpush1.bf16.msra.mxu0 0
    %487 = vmatprep.subr.bf16.mxu0 0
    %488 = vmatpush1.bf16.msra.mxu0 0
    %489 = vmatprep.subr.bf16.mxu0 0
    %490 = vmatpush1.bf16.msra.mxu0 0
    %491 = vmatprep.subr.bf16.mxu0 0
    %492 = vmatpush1.bf16.msra.mxu0 0
    %493 = vmatprep.subr.bf16.mxu0 0
    %494 = vmatpush1.bf16.msra.mxu0 0
    %495 = vmatprep.subr.bf16.mxu0 0
    %496 = vmatpush1.bf16.msra.mxu0 0
    %497 = vmatprep.subr.bf16.mxu0 0
    %498 = vmatpush1.bf16.msra.mxu0 0
    %499 = vmatprep.subr.bf16.mxu0 0
    %500 = vmatpush1.bf16.msra.mxu0 0
    %501 = vmatprep.subr.bf16.mxu0 0
    %502 = vmatpush1.bf16.msra.mxu0 0
    %503 = vmatprep.subr.bf16.mxu0 0
    %504 = vmatpush1.bf16.msra.mxu0 0
    %505 = vmatprep.subr.bf16.mxu0 0
    %506 = vmatpush1.bf16.msra.mxu0 0
    %507 = vmatprep.subr.bf16.mxu0 0
    %508 = vmatpush1.bf16.msra.mxu0 0
    %509 = vmatprep.subr.bf16.mxu0 0
    %510 = vmatpush1.bf16.msra.mxu0 0
    %511 = vmatprep.subr.bf16.mxu0 0
    %512 = vmatpush1.bf16.msra.mxu0 0
    %513 = vmatprep.subr.bf16.mxu0 0
    %514 = vmatpush1.bf16.msra.mxu0 0
    %515 = vmatprep.mubr.bf16.mxu0 0
    %516 = vmatmul.mubr.bf16.gmra.mrb[0].mxu0 %v478
    %v517 = vpop.f32.mrb[0].mxu0
    %v518 = vadd.f32 %v471, %v517
    %v519 = vpop.f32.mrb[0].mxu0
    %v520 = vpop.f32.mrb[0].mxu0
    %v521 = vadd.f32 %v474, %v520
    %v522 = vpop.f32.mrb[0].mxu0
    %523 = vdwg.mxu0
    %v524 = vld [vmem:[%s11] sm:$0x1]
    %v526 = vlaneseq
    %v527 = vshrl.u32 %v526, 7
    %v528 = vsub.s32 0, %v527
    %v529 = vrot.slane %v524, %v528
    %v531 = vmul.f32 %v518, %v529
    %v532 = vmul.f32 %v521, %v529
    %v533 = vld [vmem:[%s12] sm:$0x1]
    %v535 = vlaneseq
    %v536 = vshrl.u32 %v535, 7
    %v537 = vsub.s32 0, %v536
    %v538 = vrot.slane %v533, %v537
    %v540 = vadd.f32 %v531, %v538
    %v541 = vadd.f32 %v532, %v538
    %v542 = vpack.c.bf16 %v541, %v540
    %v543 = vld [vmem:[%s13] sm:$0xf]
    %v544 = vld [vmem:[%s13 + $0x4] sm:$0xf]
    %v547 = vunpack.c.l.b16 %v543
    %v548 = vunpack.c.l.b16 %v544
    %v549 = vpack.c.b16 %v548, %v547
    %vm551 = vcmask 130048
    %v553 = vsel %vm551, %v542, 0
    %555 = vmatprep.subr.bf16.mxu0 0
    %556 = vmatpush1.bf16.msra.mxu0 %v549
    %557 = vmatprep.subr.bf16.mxu0 0
    %558 = vmatpush1.bf16.msra.mxu0 0
    %559 = vmatprep.subr.bf16.mxu0 0
    %560 = vmatpush1.bf16.msra.mxu0 0
    %561 = vmatprep.subr.bf16.mxu0 0
    %562 = vmatpush1.bf16.msra.mxu0 0
    %563 = vmatprep.subr.bf16.mxu0 0
    %564 = vmatpush1.bf16.msra.mxu0 0
    %565 = vmatprep.subr.bf16.mxu0 0
    %566 = vmatpush1.bf16.msra.mxu0 0
    %567 = vmatprep.subr.bf16.mxu0 0
    %568 = vmatpush1.bf16.msra.mxu0 0
    %569 = vmatprep.subr.bf16.mxu0 0
    %570 = vmatpush1.bf16.msra.mxu0 0
    %571 = vmatprep.subr.bf16.mxu0 0
    %572 = vmatpush1.bf16.msra.mxu0 0
    %573 = vmatprep.subr.bf16.mxu0 0
    %574 = vmatpush1.bf16.msra.mxu0 0
    %575 = vmatprep.subr.bf16.mxu0 0
    %576 = vmatpush1.bf16.msra.mxu0 0
    %577 = vmatprep.subr.bf16.mxu0 0
    %578 = vmatpush1.bf16.msra.mxu0 0
    %579 = vmatprep.subr.bf16.mxu0 0
    %580 = vmatpush1.bf16.msra.mxu0 0
    %581 = vmatprep.subr.bf16.mxu0 0
    %582 = vmatpush1.bf16.msra.mxu0 0
    %583 = vmatprep.subr.bf16.mxu0 0
    %584 = vmatpush1.bf16.msra.mxu0 0
    %585 = vmatprep.subr.bf16.mxu0 0
    %586 = vmatpush1.bf16.msra.mxu0 0
    %587 = vmatprep.mubr.bf16.mxu0 0
    %588 = vmatmul.mubr.bf16.gmra.mrb[0].mxu0 %v553
    %v589 = vpop.f32.mrb[0].mxu0
    %v590 = vadd.f32 0.0, %v589
    %v591 = vpop.f32.mrb[0].mxu0
    %v592 = vpop.f32.mrb[0].mxu0
    %v593 = vadd.f32 0.0, %v592
    %v594 = vpop.f32.mrb[0].mxu0
    %595 = vdwg.mxu0
    %s596 = scalar_lea.vmem %s0, %s258
    %v597 = vld [vmem:[%s596] sm:$0xff]
    %v598 = vld [vmem:[%s596 + $0x8] sm:$0xff]
    %v599 = vadd.f32 %v597, %v590
    %v600 = vadd.f32 %v598, %v593
    %v601 = vmax.f32 %v599, 0.0
    %v602 = vmax.f32 %v600, 0.0
    %vm603 = vcmask 261120
    %604 = vst.msk [vmem:[#allocation4] sm:$0xff] %vm603, %v601
    %605 = vst.msk [vmem:[#allocation4 + $0x8] sm:$0xff] %vm603, %v602
    // Predicated region
    $region62: #{tpu_custom_call.1} parent=1 // pred_check
      _
    $region63: #{tpu_custom_call.1} parent=1 // pred_check_branch
      %607 = sbr.rel (0) target = $region65
    $region64: #{tpu_custom_call.1} parent=1 // pred_region
      %s609 = ssub.s32 256, 256
      %610 = vsyncadd [#allocation5], %s609
      %s611 = sshll.u32 [#allocation4], 4
      %s612 = int_to_ptr.vmem [resolvable:$true] %s611
      %617 = dma.vmem_to_hbm [thread:$0]  %s612, 256, %s14, [#allocation5], 128, 128, 8
    $region65: #{tpu_custom_call.1} parent=1 // pred_fallthru
      _
    // Predicated region
    $region66: #{tpu_custom_call.1} parent=1 // pred_check
      _
    $region67: #{tpu_custom_call.1} parent=1 // pred_check_branch
      %619 = sbr.rel (0) target = $region69
    $region68: #{tpu_custom_call.1} parent=1 // pred_region
      %620 = dma.done [#allocation5], 256
    $region69: #{tpu_custom_call.1} parent=1 // pred_fallthru
      _
    %621 = vsyncpa [#allocation5], 1

</llo_original>
